<compile_context>
chip_gen: v5e
topology: v5e:2x2
jax: 0.10.0
libtpu: 0.0.40
codegen_flags: <defaults>
</compile_context>

<pallas_src>
import functools

import jax
import jax.numpy as jnp
from jax.experimental import pallas as pl
from jax.experimental.pallas import tpu as pltpu


# ---------------------------------------------------------------------------
# Fused Pallas kernel: all TemporalBlocks + final Linear, one batch tile.
# ---------------------------------------------------------------------------
def tcn_fused_kernel(x_ref, wconv_ref, bconv_ref, wd_ref, bd_ref,
                     wlin_ref, blin_ref, o_ref, *, dilations, ds_index, T):
    """x_ref: (Bt, T, Cp) f32   o_ref: (Bt, 1, Op) f32

    wconv_ref: (L, 2, 2*Cp, Cp) bf16  stacked [tap0; tap1] weights, conv1/conv2
    bconv_ref: (L, 2, 1, Cp)    f32   conv biases
    wd_ref:    (Lds, Cp, Cp)    bf16  1x1 downsample weights (compacted)
    bd_ref:    (Lds, 1, Cp)     f32   downsample biases (compacted)
    wlin_ref:  (Cp, Op)         bf16  final linear (padded rows/cols are zero)
    blin_ref:  (1, Op)          f32
    """
    Bt = x_ref.shape[0]
    Cp = x_ref.shape[2]
    M = Bt * T

    x = x_ref[...].reshape(M, Cp)                               # (Bt*T, Cp) f32
    # time index within each batch element, reused for every layer's causal mask
    t_mod = jax.lax.broadcasted_iota(jnp.int32, (M, 1), 0) % T

    for l, d in enumerate(dilations):
        # Hoisted: one (M, Cp) broadcast per layer, reused by both convs.
        keep = jnp.broadcast_to(t_mod >= d, (M, Cp))

        def conv(v, w, b):
            # causal shift: v[t] -> v[t-d], zeros for t < d (within each batch
            # element); the flat roll + (t mod T) >= d mask is exact across
            # batch-element boundaries and degrades gracefully for d >= T.
            shifted = jnp.where(keep, pltpu.roll(v, shift=d, axis=0), 0.0)
            xx = jnp.concatenate([shifted, v], axis=-1).astype(jnp.bfloat16)
            acc = jnp.dot(xx, w, preferred_element_type=jnp.float32)   # bf16 MXU
            return jnp.maximum(acc + b, 0.0)                           # f32 VPU

        h = conv(x, wconv_ref[l, 0], bconv_ref[l, 0])            # conv1 + ReLU
        h = conv(h, wconv_ref[l, 1], bconv_ref[l, 1])            # conv2 + ReLU

        di = ds_index[l]                                         # static per layer
        if di >= 0:
            res = (jnp.dot(x.astype(jnp.bfloat16), wd_ref[di],
                           preferred_element_type=jnp.float32)
                   + bd_ref[di])
        else:
            res = x                                              # identity residual

        x = jnp.maximum(h + res, 0.0)                            # block output

    # Final Linear on the last time step of every batch element in this tile:
    # single strided extraction (no per-element Python gather/concat).
    last = x.reshape(Bt, T, Cp)[:, T - 1, :]                     # (Bt, Cp)
    out = (jnp.dot(last.astype(jnp.bfloat16), wlin_ref[...],
                   preferred_element_type=jnp.float32)
           + blin_ref[...])                                      # (Bt, Op) f32
    o_ref[:, 0, :] = out                                         # lane-dense store


# ---------------------------------------------------------------------------
# Wrapper / glue
# ---------------------------------------------------------------------------
def _pick_bt(B, T, Cp, target_rows=2048, act_vmem_budget=8 << 20):
    """Batch elements per grid step.

    Aim for M = Bt*T around a few hundred to ~2048 rows (MXU-efficient tiles),
    bounded by an activation-VMEM budget.  No artificial "grid >= 2" forcing —
    only v7x's two TensorCores benefit from multiple grid steps, and tiny
    blocks cost far more than they buy on single-TC chips.
    """
    row_cap = max(1, target_rows // T)
    vmem_cap = max(1, act_vmem_budget // (T * Cp * 4 * 8))   # ~8 live (M,Cp) f32
    cap = max(1, min(row_cap, vmem_cap))
    best = 1
    for bt in range(1, B + 1):
        if B % bt == 0 and bt <= cap:
            best = bt
    return best


def _build_call(packed, B, T, Cp, Op, Bt, single_buffer_weights):
    weight_arrays = (packed["wconv"], packed["bconv"], packed["wd"],
                     packed["bd"], packed["wlin"], packed["blin"])

    def wspec(arr):
        kwargs = {}
        if single_buffer_weights:
            # Grid-invariant slabs: no need for a second (double-buffer) copy.
            kwargs["pipeline_mode"] = pl.Buffered(buffer_count=1)
        return pl.BlockSpec(arr.shape, lambda b, nd=arr.ndim: (0,) * nd, **kwargs)

    nbytes = lambda a: int(a.size) * a.dtype.itemsize
    weight_bytes = sum(nbytes(a) for a in weight_arrays)
    x_block_bytes = Bt * T * Cp * 4
    out_block_bytes = Bt * 1 * Op * 4
    act_bytes = Bt * T * Cp * 4
    wfac = 1 if single_buffer_weights else 2
    vmem_limit = (wfac * weight_bytes + 2 * (x_block_bytes + out_block_bytes)
                  + 12 * act_bytes + (8 << 20))
    vmem_limit = int(min(max(vmem_limit, 32 << 20), 128 << 20))

    L = len(packed["dilations"])
    n_ds = sum(1 for i in packed["ds_index"] if i >= 0)
    flops = int(2 * B * T * (L * 2 * (2 * Cp) * Cp + n_ds * Cp * Cp)
                + 2 * B * Cp * Op)
    bytes_accessed = int(4 * B * T * Cp + weight_bytes + 4 * B * Op)

    kern = functools.partial(tcn_fused_kernel,
                             dilations=packed["dilations"],
                             ds_index=packed["ds_index"], T=T)

    return pl.pallas_call(
        kern,
        out_shape=jax.ShapeDtypeStruct((B, 1, Op), jnp.float32),
        grid=(B // Bt,),
        in_specs=[pl.BlockSpec((Bt, T, Cp), lambda b: (b, 0, 0))]
                 + [wspec(a) for a in weight_arrays],
        out_specs=pl.BlockSpec((Bt, 1, Op), lambda b: (b, 0, 0)),
        compiler_params=pltpu.CompilerParams(
            dimension_semantics=("parallel",),
            vmem_limit_bytes=vmem_limit),
        cost_estimate=pl.CostEstimate(flops=flops, transcendentals=0,
                                      bytes_accessed=bytes_accessed),
    )


def tcn_forward(x_ncl, packed):
    """Replicates TCN.forward: x (B, in_dim, T) -> (B, out_dim)."""
    B, in_dim, T = x_ncl.shape
    Cp, Op, out_dim = packed["Cp"], packed["Op"], packed["out_dim"]

    x = jnp.transpose(x_ncl, (0, 2, 1))                      # NCL -> (B, T, C)
    x = jnp.pad(x, ((0, 0), (0, 0), (0, Cp - in_dim)))       # lane-dense channels

    Bt = _pick_bt(B, T, Cp)
    args = (x, packed["wconv"], packed["bconv"], packed["wd"], packed["bd"],
            packed["wlin"], packed["blin"])

    out3 = None
    for single_buf in (True, False):
        try:
            call = _build_call(packed, B, T, Cp, Op, Bt, single_buf)
            out3 = jax.block_until_ready(call(*args))
            break
        except Exception:
            if not single_buf:
                raise        # already the conservative path -> real error
            # Fallback: installed JAX rejected single-buffered weight specs.
            continue

    return out3[:, 0, :out_dim]


# ---------------------------------------------------------------------------
# Parameter packing: raw per-layer matrices -> padded, stacked kernel slabs.
# ---------------------------------------------------------------------------
def pack_params(block_params, w_lin, b_lin, out_dim):
    max_c = max([p["w1a"].shape[0] for p in block_params]
                + [p["w1a"].shape[1] for p in block_params]
                + [w_lin.shape[0]])
    Cp = 128 * (-(-max_c // 128))                 # channels -> multiple of 128
    Op = 128 * (-(-out_dim // 128))               # lane-dense output block
    L = len(block_params)
    n_ds = sum(1 for p in block_params if p["wd"] is not None)

    wconv = jnp.zeros((L, 2, 2 * Cp, Cp), jnp.float32)
    bconv = jnp.zeros((L, 2, 1, Cp), jnp.float32)
    wd = jnp.zeros((max(1, n_ds), Cp, Cp), jnp.float32)       # compacted
    bd = jnp.zeros((max(1, n_ds), 1, Cp), jnp.float32)
    dilations, ds_index = [], []
    ds_pos = 0

    for l, p in enumerate(block_params):
        cin, cout = p["w1a"].shape
        # conv1: rows [0:Cp] act on shifted input, rows [Cp:2Cp] on current input
        wconv = wconv.at[l, 0, 0:cin, 0:cout].set(p["w1a"])
        wconv = wconv.at[l, 0, Cp:Cp + cin, 0:cout].set(p["w1b"])
        # conv2: cout -> cout
        wconv = wconv.at[l, 1, 0:cout, 0:cout].set(p["w2a"])
        wconv = wconv.at[l, 1, Cp:Cp + cout, 0:cout].set(p["w2b"])
        bconv = bconv.at[l, 0, 0, 0:cout].set(p["b1"][0])
        bconv = bconv.at[l, 1, 0, 0:cout].set(p["b2"][0])
        if p["wd"] is not None:
            wd = wd.at[ds_pos, 0:cin, 0:cout].set(p["wd"])
            bd = bd.at[ds_pos, 0, 0:cout].set(p["bd"][0])
            ds_index.append(ds_pos)
            ds_pos += 1
        else:
            ds_index.append(-1)
        dilations.append(p["dilation"])

    c_last = w_lin.shape[0]
    wlin_p = jnp.zeros((Cp, Op), jnp.float32).at[0:c_last, 0:out_dim].set(w_lin)
    blin_p = jnp.zeros((1, Op), jnp.float32).at[0, 0:out_dim].set(b_lin[0])

    # Matmul operands in bf16 (f32 accumulate in-kernel); biases stay f32.
    return dict(wconv=wconv.astype(jnp.bfloat16), bconv=bconv,
                wd=wd.astype(jnp.bfloat16), bd=bd,
                wlin=wlin_p.astype(jnp.bfloat16), blin=blin_p,
                dilations=tuple(dilations), ds_index=tuple(ds_index),
                Cp=Cp, Op=Op, out_dim=out_dim)


# ---------------------------------------------------------------------------
# Deterministic init mirroring the module (N(0,0.01) convs, xavier linear).
# weight_norm reparam is forward-identical for a fixed effective weight.
# ---------------------------------------------------------------------------
def init_params(key, in_dim, num_channels, out_dim, kernel_size=2):
    assert kernel_size == 2
    params = []
    cin = in_dim
    for i, cout in enumerate(num_channels):
        key, k1, k2, k3, k4, kd, kdb = jax.random.split(key, 7)
        W1 = 0.01 * jax.random.normal(k1, (cout, cin, 2), jnp.float32)
        b1 = 0.01 * jax.random.normal(k2, (cout,), jnp.float32)
        W2 = 0.01 * jax.random.normal(k3, (cout, cout, 2), jnp.float32)
        b2 = 0.01 * jax.random.normal(k4, (cout,), jnp.float32)
        if cin != cout:
            wd = (0.01 * jax.random.normal(kd, (cout, cin), jnp.float32)).T
            bd = 0.01 * jax.random.normal(kdb, (cout,), jnp.float32)[None, :]
        else:
            wd, bd = None, None                  # downsample is None -> identity
        params.append(dict(
            w1a=W1[:, :, 0].T, w1b=W1[:, :, 1].T, b1=b1[None, :],
            w2a=W2[:, :, 0].T, w2b=W2[:, :, 1].T, b2=b2[None, :],
            wd=wd, bd=bd, dilation=2 ** i))
        cin = cout
    key, kl = jax.random.split(key)
    c_last = num_channels[-1]
    limit = (6.0 / (c_last + out_dim)) ** 0.5
    w_lin = jax.random.uniform(kl, (c_last, out_dim), jnp.float32, -limit, limit)
    b_lin = jnp.zeros((1, out_dim), jnp.float32)
    return params, w_lin, b_lin


# ---------------------------------------------------------------------------
# Pure-JAX reference (unpadded f32 weights) for correctness.
# ---------------------------------------------------------------------------
def ref_forward(x_ncl, block_params, w_lin, b_lin):
    x = jnp.transpose(x_ncl, (0, 2, 1))
    for p in block_params:
        d = p["dilation"]

        def shift(v):
            if d >= v.shape[1]:                  # graceful for d >= T
                return jnp.zeros_like(v)
            z = jnp.zeros_like(v[:, :d, :])
            return jnp.concatenate([z, v[:, :-d, :]], axis=1)

        h = jnp.maximum(shift(x) @ p["w1a"] + x @ p["w1b"] + p["b1"], 0.0)
        h2 = jnp.maximum(shift(h) @ p["w2a"] + h @ p["w2b"] + p["b2"], 0.0)
        res = x if p["wd"] is None else (x @ p["wd"] + p["bd"])
        x = jnp.maximum(h2 + res, 0.0)
    return x[:, -1, :] @ w_lin + b_lin


if __name__ == "__main__":
    # Small config consistent with TCN(in_dim, out_dim, num_channels, stack_size)
    B, in_dim, stack_size = 2, 4, 16
    num_channels = (8, 8)
    out_dim = 4

    key = jax.random.PRNGKey(0)
    key, kx, kp = jax.random.split(key, 3)
    x = jax.random.normal(kx, (B, in_dim, stack_size), jnp.float32)   # NCL input

    block_params, w_lin, b_lin = init_params(kp, in_dim, num_channels, out_dim)
    packed = pack_params(block_params, w_lin, b_lin, out_dim)

    out = tcn_forward(x, packed)
    out = jax.block_until_ready(out)

    ref = ref_forward(x, block_params, w_lin, b_lin)
    assert out.shape == (B, out_dim)
    # Matmul operands are bf16 (f32 accumulate) -> loosened tolerance vs the
    # f32 reference; errors observed are well below these bounds at this scale.
    assert jnp.allclose(out, ref, atol=1e-2, rtol=5e-2), "mismatch vs reference"

    print("KERNEL_OK")
</pallas_src>

<mosaic_0001>
module attributes {stable_mosaic.version = 11 : i64} {
  func.func @tcn_fused_kernel(%arg0: i32, %arg1: memref<2x16x128xf32, #tpu.memory_space<vmem>>, %arg2: memref<2x2x256x128xbf16, #tpu.memory_space<vmem>>, %arg3: memref<2x2x1x128xf32, #tpu.memory_space<vmem>>, %arg4: memref<1x128x128xbf16, #tpu.memory_space<vmem>>, %arg5: memref<1x1x128xf32, #tpu.memory_space<vmem>>, %arg6: memref<128x128xbf16, #tpu.memory_space<vmem>>, %arg7: memref<1x128xf32, #tpu.memory_space<vmem>>, %arg8: memref<2x1x128xf32, #tpu.memory_space<vmem>>) attributes {dimension_semantics = [#tpu.dimension_semantics<parallel>], iteration_bounds = array<i64: 1>, scalar_prefetch = 0 : i64, scratch_operands = 0 : i64, tpu.core_type = #tpu.core_type<tc>, window_params = [{transform_indices = @transform_0, window_bounds = array<i64: 2, 16, 128>}, {pipeline_mode = #tpu.pipeline_mode<synchronous>, transform_indices = @transform_1, window_bounds = array<i64: 2, 2, 256, 128>}, {pipeline_mode = #tpu.pipeline_mode<synchronous>, transform_indices = @transform_2, window_bounds = array<i64: 2, 2, 1, 128>}, {pipeline_mode = #tpu.pipeline_mode<synchronous>, transform_indices = @transform_3, window_bounds = array<i64: 1, 128, 128>}, {pipeline_mode = #tpu.pipeline_mode<synchronous>, transform_indices = @transform_4, window_bounds = array<i64: 1, 1, 128>}, {pipeline_mode = #tpu.pipeline_mode<synchronous>, transform_indices = @transform_5, window_bounds = array<i64: 128, 128>}, {pipeline_mode = #tpu.pipeline_mode<synchronous>, transform_indices = @transform_6, window_bounds = array<i64: 1, 128>}, {transform_indices = @transform_7, window_bounds = array<i64: 2, 1, 128>}]} {
    %c0 = arith.constant 0 : index
    %c0_0 = arith.constant 0 : index
    %c0_1 = arith.constant 0 : index
    %0 = vector.load %arg1[%c0, %c0_0, %c0_1] : memref<2x16x128xf32, #tpu.memory_space<vmem>>, vector<2x16x128xf32>
    %1 = vector.shape_cast %0 : vector<2x16x128xf32> to vector<32x128xf32>
    %2 = tpu.iota {dimensions = array<i32: 0>} : vector<32x1xi32>
    %c16_i32 = arith.constant 16 : i32
    %c0_i32 = arith.constant 0 : i32
    %3 = arith.cmpi eq, %c16_i32, %c0_i32 : i32
    %c1_i32 = arith.constant 1 : i32
    %4 = arith.select %3, %c1_i32, %c16_i32 : i32
    %5 = vector.broadcast %4 : i32 to vector<32x1xi32>
    %6 = arith.remsi %2, %5 : vector<32x1xi32>
    %c0_i32_2 = arith.constant 0 : i32
    %7 = vector.broadcast %c0_i32_2 : i32 to vector<32x1xi32>
    %8 = arith.cmpi ne, %6, %7 : vector<32x1xi32>
    %c0_i32_3 = arith.constant 0 : i32
    %9 = vector.broadcast %c0_i32_3 : i32 to vector<32x1xi32>
    %10 = arith.cmpi slt, %6, %9 : vector<32x1xi32>
    %c0_i32_4 = arith.constant 0 : i32
    %11 = arith.cmpi slt, %4, %c0_i32_4 : i32
    %12 = vector.broadcast %11 : i1 to vector<32x1xi1>
    %13 = vector.broadcast %12 : vector<32x1xi1> to vector<32x1xi1>
    %14 = arith.xori %10, %13 : vector<32x1xi1>
    %15 = arith.andi %14, %8 : vector<32x1xi1>
    %16 = vector.broadcast %4 : i32 to vector<32x1xi32>
    %17 = arith.addi %6, %16 : vector<32x1xi32>
    %18 = arith.select %15, %17, %6 : vector<32x1xi1>, vector<32x1xi32>
    %c1_i32_5 = arith.constant 1 : i32
    %19 = vector.broadcast %c1_i32_5 : i32 to vector<32x1xi32>
    %20 = arith.cmpi sge, %18, %19 : vector<32x1xi32>
    %21 = vector.shape_cast %20 : vector<32x1xi1> to vector<32x1xi1>
    %22 = vector.broadcast %21 : vector<32x1xi1> to vector<32x128xi1>
    %c0_6 = arith.constant 0 : index
    %c0_7 = arith.constant 0 : index
    %c0_8 = arith.constant 0 : index
    %c0_9 = arith.constant 0 : index
    %23 = vector.load %arg2[%c0_6, %c0_7, %c0_8, %c0_9] : memref<2x2x256x128xbf16, #tpu.memory_space<vmem>>, vector<1x1x256x128xbf16>
    %24 = vector.shape_cast %23 : vector<1x1x256x128xbf16> to vector<256x128xbf16>
    %c0_10 = arith.constant 0 : index
    %c0_11 = arith.constant 0 : index
    %c0_12 = arith.constant 0 : index
    %c0_13 = arith.constant 0 : index
    %25 = vector.load %arg3[%c0_10, %c0_11, %c0_12, %c0_13] : memref<2x2x1x128xf32, #tpu.memory_space<vmem>>, vector<1x1x1x128xf32>
    %26 = vector.shape_cast %25 : vector<1x1x1x128xf32> to vector<1x128xf32>
    %c1_i32_14 = arith.constant 1 : i32
    %27 = tpu.dynamic_rotate %1 by %c1_i32_14 dim 0 : vector<32x128xf32>, i32 -> vector<32x128xf32>
    %cst = arith.constant 0.000000e+00 : f32
    %28 = vector.broadcast %cst : f32 to vector<32x128xf32>
    %29 = arith.select %22, %27, %28 : vector<32x128xi1>, vector<32x128xf32>
    %30 = tpu.concatenate %29, %1 in 1 : vector<32x128xf32>, vector<32x128xf32> -> vector<32x256xf32>
    %31 = arith.truncf %30 : vector<32x256xf32> to vector<32x256xbf16>
    %cst_15 = arith.constant dense<0.000000e+00> : vector<32x128xf32>
    %32 = tpu.matmul %31, %24, %cst_15 {dimension_numbers = #tpu.dot_dimension_numbers<[1], [0], [0], [1], [0, 0, 1, 1], [], []>} : vector<32x256xbf16>, vector<256x128xbf16>, vector<32x128xf32> -> vector<32x128xf32>
    %33 = vector.broadcast %26 : vector<1x128xf32> to vector<32x128xf32>
    %34 = arith.addf %32, %33 : vector<32x128xf32>
    %cst_16 = arith.constant 0.000000e+00 : f32
    %35 = vector.broadcast %cst_16 : f32 to vector<32x128xf32>
    %36 = arith.maximumf %34, %35 : vector<32x128xf32>
    %c0_17 = arith.constant 0 : index
    %c1 = arith.constant 1 : index
    %c0_18 = arith.constant 0 : index
    %c0_19 = arith.constant 0 : index
    %37 = vector.load %arg2[%c0_17, %c1, %c0_18, %c0_19] : memref<2x2x256x128xbf16, #tpu.memory_space<vmem>>, vector<1x1x256x128xbf16>
    %38 = vector.shape_cast %37 : vector<1x1x256x128xbf16> to vector<256x128xbf16>
    %c0_20 = arith.constant 0 : index
    %c1_21 = arith.constant 1 : index
    %c0_22 = arith.constant 0 : index
    %c0_23 = arith.constant 0 : index
    %39 = vector.load %arg3[%c0_20, %c1_21, %c0_22, %c0_23] : memref<2x2x1x128xf32, #tpu.memory_space<vmem>>, vector<1x1x1x128xf32>
    %40 = vector.shape_cast %39 : vector<1x1x1x128xf32> to vector<1x128xf32>
    %c1_i32_24 = arith.constant 1 : i32
    %41 = tpu.dynamic_rotate %36 by %c1_i32_24 dim 0 : vector<32x128xf32>, i32 -> vector<32x128xf32>
    %cst_25 = arith.constant 0.000000e+00 : f32
    %42 = vector.broadcast %cst_25 : f32 to vector<32x128xf32>
    %43 = arith.select %22, %41, %42 : vector<32x128xi1>, vector<32x128xf32>
    %44 = tpu.concatenate %43, %36 in 1 : vector<32x128xf32>, vector<32x128xf32> -> vector<32x256xf32>
    %45 = arith.truncf %44 : vector<32x256xf32> to vector<32x256xbf16>
    %cst_26 = arith.constant dense<0.000000e+00> : vector<32x128xf32>
    %46 = tpu.matmul %45, %38, %cst_26 {dimension_numbers = #tpu.dot_dimension_numbers<[1], [0], [0], [1], [0, 0, 1, 1], [], []>} : vector<32x256xbf16>, vector<256x128xbf16>, vector<32x128xf32> -> vector<32x128xf32>
    %47 = vector.broadcast %40 : vector<1x128xf32> to vector<32x128xf32>
    %48 = arith.addf %46, %47 : vector<32x128xf32>
    %cst_27 = arith.constant 0.000000e+00 : f32
    %49 = vector.broadcast %cst_27 : f32 to vector<32x128xf32>
    %50 = arith.maximumf %48, %49 : vector<32x128xf32>
    %51 = arith.truncf %1 : vector<32x128xf32> to vector<32x128xbf16>
    %c0_28 = arith.constant 0 : index
    %c0_29 = arith.constant 0 : index
    %c0_30 = arith.constant 0 : index
    %52 = vector.load %arg4[%c0_28, %c0_29, %c0_30] : memref<1x128x128xbf16, #tpu.memory_space<vmem>>, vector<1x128x128xbf16>
    %53 = vector.shape_cast %52 : vector<1x128x128xbf16> to vector<128x128xbf16>
    %cst_31 = arith.constant dense<0.000000e+00> : vector<32x128xf32>
    %54 = tpu.matmul %51, %53, %cst_31 {dimension_numbers = #tpu.dot_dimension_numbers<[1], [0], [0], [1], [0, 0, 1, 1], [], []>} : vector<32x128xbf16>, vector<128x128xbf16>, vector<32x128xf32> -> vector<32x128xf32>
    %c0_32 = arith.constant 0 : index
    %c0_33 = arith.constant 0 : index
    %c0_34 = arith.constant 0 : index
    %55 = vector.load %arg5[%c0_32, %c0_33, %c0_34] : memref<1x1x128xf32, #tpu.memory_space<vmem>>, vector<1x1x128xf32>
    %56 = vector.shape_cast %55 : vector<1x1x128xf32> to vector<1x128xf32>
    %57 = vector.broadcast %56 : vector<1x128xf32> to vector<32x128xf32>
    %58 = arith.addf %54, %57 : vector<32x128xf32>
    %59 = arith.addf %50, %58 : vector<32x128xf32>
    %cst_35 = arith.constant 0.000000e+00 : f32
    %60 = vector.broadcast %cst_35 : f32 to vector<32x128xf32>
    %61 = arith.maximumf %59, %60 : vector<32x128xf32>
    %c2_i32 = arith.constant 2 : i32
    %62 = vector.broadcast %c2_i32 : i32 to vector<32x1xi32>
    %63 = arith.cmpi sge, %18, %62 : vector<32x1xi32>
    %64 = vector.shape_cast %63 : vector<32x1xi1> to vector<32x1xi1>
    %65 = vector.broadcast %64 : vector<32x1xi1> to vector<32x128xi1>
    %c1_36 = arith.constant 1 : index
    %c0_37 = arith.constant 0 : index
    %c0_38 = arith.constant 0 : index
    %c0_39 = arith.constant 0 : index
    %66 = vector.load %arg2[%c1_36, %c0_37, %c0_38, %c0_39] : memref<2x2x256x128xbf16, #tpu.memory_space<vmem>>, vector<1x1x256x128xbf16>
    %67 = vector.shape_cast %66 : vector<1x1x256x128xbf16> to vector<256x128xbf16>
    %c1_40 = arith.constant 1 : index
    %c0_41 = arith.constant 0 : index
    %c0_42 = arith.constant 0 : index
    %c0_43 = arith.constant 0 : index
    %68 = vector.load %arg3[%c1_40, %c0_41, %c0_42, %c0_43] : memref<2x2x1x128xf32, #tpu.memory_space<vmem>>, vector<1x1x1x128xf32>
    %69 = vector.shape_cast %68 : vector<1x1x1x128xf32> to vector<1x128xf32>
    %c2_i32_44 = arith.constant 2 : i32
    %70 = tpu.dynamic_rotate %61 by %c2_i32_44 dim 0 : vector<32x128xf32>, i32 -> vector<32x128xf32>
    %cst_45 = arith.constant 0.000000e+00 : f32
    %71 = vector.broadcast %cst_45 : f32 to vector<32x128xf32>
    %72 = arith.select %65, %70, %71 : vector<32x128xi1>, vector<32x128xf32>
    %73 = tpu.concatenate %72, %61 in 1 : vector<32x128xf32>, vector<32x128xf32> -> vector<32x256xf32>
    %74 = arith.truncf %73 : vector<32x256xf32> to vector<32x256xbf16>
    %cst_46 = arith.constant dense<0.000000e+00> : vector<32x128xf32>
    %75 = tpu.matmul %74, %67, %cst_46 {dimension_numbers = #tpu.dot_dimension_numbers<[1], [0], [0], [1], [0, 0, 1, 1], [], []>} : vector<32x256xbf16>, vector<256x128xbf16>, vector<32x128xf32> -> vector<32x128xf32>
    %76 = vector.broadcast %69 : vector<1x128xf32> to vector<32x128xf32>
    %77 = arith.addf %75, %76 : vector<32x128xf32>
    %cst_47 = arith.constant 0.000000e+00 : f32
    %78 = vector.broadcast %cst_47 : f32 to vector<32x128xf32>
    %79 = arith.maximumf %77, %78 : vector<32x128xf32>
    %c1_48 = arith.constant 1 : index
    %c1_49 = arith.constant 1 : index
    %c0_50 = arith.constant 0 : index
    %c0_51 = arith.constant 0 : index
    %80 = vector.load %arg2[%c1_48, %c1_49, %c0_50, %c0_51] : memref<2x2x256x128xbf16, #tpu.memory_space<vmem>>, vector<1x1x256x128xbf16>
    %81 = vector.shape_cast %80 : vector<1x1x256x128xbf16> to vector<256x128xbf16>
    %c1_52 = arith.constant 1 : index
    %c1_53 = arith.constant 1 : index
    %c0_54 = arith.constant 0 : index
    %c0_55 = arith.constant 0 : index
    %82 = vector.load %arg3[%c1_52, %c1_53, %c0_54, %c0_55] : memref<2x2x1x128xf32, #tpu.memory_space<vmem>>, vector<1x1x1x128xf32>
    %83 = vector.shape_cast %82 : vector<1x1x1x128xf32> to vector<1x128xf32>
    %c2_i32_56 = arith.constant 2 : i32
    %84 = tpu.dynamic_rotate %79 by %c2_i32_56 dim 0 : vector<32x128xf32>, i32 -> vector<32x128xf32>
    %cst_57 = arith.constant 0.000000e+00 : f32
    %85 = vector.broadcast %cst_57 : f32 to vector<32x128xf32>
    %86 = arith.select %65, %84, %85 : vector<32x128xi1>, vector<32x128xf32>
    %87 = tpu.concatenate %86, %79 in 1 : vector<32x128xf32>, vector<32x128xf32> -> vector<32x256xf32>
    %88 = arith.truncf %87 : vector<32x256xf32> to vector<32x256xbf16>
    %cst_58 = arith.constant dense<0.000000e+00> : vector<32x128xf32>
    %89 = tpu.matmul %88, %81, %cst_58 {dimension_numbers = #tpu.dot_dimension_numbers<[1], [0], [0], [1], [0, 0, 1, 1], [], []>} : vector<32x256xbf16>, vector<256x128xbf16>, vector<32x128xf32> -> vector<32x128xf32>
    %90 = vector.broadcast %83 : vector<1x128xf32> to vector<32x128xf32>
    %91 = arith.addf %89, %90 : vector<32x128xf32>
    %cst_59 = arith.constant 0.000000e+00 : f32
    %92 = vector.broadcast %cst_59 : f32 to vector<32x128xf32>
    %93 = arith.maximumf %91, %92 : vector<32x128xf32>
    %94 = arith.addf %93, %61 : vector<32x128xf32>
    %cst_60 = arith.constant 0.000000e+00 : f32
    %95 = vector.broadcast %cst_60 : f32 to vector<32x128xf32>
    %96 = arith.maximumf %94, %95 : vector<32x128xf32>
    %97 = vector.shape_cast %96 : vector<32x128xf32> to vector<2x16x128xf32>
    %98 = vector.extract_strided_slice %97 {offsets = [0, 15, 0], sizes = [2, 1, 128], strides = [1, 1, 1]} : vector<2x16x128xf32> to vector<2x1x128xf32>
    %99 = vector.shape_cast %98 : vector<2x1x128xf32> to vector<2x128xf32>
    %100 = arith.truncf %99 : vector<2x128xf32> to vector<2x128xbf16>
    %c0_61 = arith.constant 0 : index
    %c0_62 = arith.constant 0 : index
    %101 = vector.load %arg6[%c0_61, %c0_62] : memref<128x128xbf16, #tpu.memory_space<vmem>>, vector<128x128xbf16>
    %cst_63 = arith.constant dense<0.000000e+00> : vector<2x128xf32>
    %102 = tpu.matmul %100, %101, %cst_63 {dimension_numbers = #tpu.dot_dimension_numbers<[1], [0], [0], [1], [0, 0, 1, 1], [], []>} : vector<2x128xbf16>, vector<128x128xbf16>, vector<2x128xf32> -> vector<2x128xf32>
    %c0_64 = arith.constant 0 : index
    %c0_65 = arith.constant 0 : index
    %103 = vector.load %arg7[%c0_64, %c0_65] : memref<1x128xf32, #tpu.memory_space<vmem>>, vector<1x128xf32>
    %104 = vector.broadcast %103 : vector<1x128xf32> to vector<2x128xf32>
    %105 = arith.addf %102, %104 : vector<2x128xf32>
    %c0_66 = arith.constant 0 : index
    %c0_67 = arith.constant 0 : index
    %c0_68 = arith.constant 0 : index
    %106 = vector.load %arg8[%c0_66, %c0_67, %c0_68] : memref<2x1x128xf32, #tpu.memory_space<vmem>>, vector<2x1x128xf32>
    %107 = vector.shape_cast %106 : vector<2x1x128xf32> to vector<2x128xf32>
    %108 = vector.shape_cast %105 : vector<2x128xf32> to vector<2x1x128xf32>
    tpu.vector_store %arg8[%c0_66, %c0_67, %c0_68], %108 {strides = array<i32>} : memref<2x1x128xf32, #tpu.memory_space<vmem>>, vector<2x1x128xf32>,
    return
  }
  func.func @transform_0(%arg0: i32) -> (i32, i32, i32) {
    %c0_i32 = arith.constant 0 : i32
    %c0_i32_0 = arith.constant 0 : i32
    %c0_i32_1 = arith.constant 0 : i32
    return %arg0, %c0_i32, %c0_i32_0 : i32, i32, i32
  }
  func.func @transform_1(%arg0: i32) -> (i32, i32, i32, i32) {
    %c0_i32 = arith.constant 0 : i32
    %c0_i32_0 = arith.constant 0 : i32
    %c0_i32_1 = arith.constant 0 : i32
    %c0_i32_2 = arith.constant 0 : i32
    %c0_i32_3 = arith.constant 0 : i32
    return %c0_i32, %c0_i32_0, %c0_i32_1, %c0_i32_2 : i32, i32, i32, i32
  }
  func.func @transform_2(%arg0: i32) -> (i32, i32, i32, i32) {
    %c0_i32 = arith.constant 0 : i32
    %c0_i32_0 = arith.constant 0 : i32
    %c0_i32_1 = arith.constant 0 : i32
    %c0_i32_2 = arith.constant 0 : i32
    %c0_i32_3 = arith.constant 0 : i32
    return %c0_i32, %c0_i32_0, %c0_i32_1, %c0_i32_2 : i32, i32, i32, i32
  }
  func.func @transform_3(%arg0: i32) -> (i32, i32, i32) {
    %c0_i32 = arith.constant 0 : i32
    %c0_i32_0 = arith.constant 0 : i32
    %c0_i32_1 = arith.constant 0 : i32
    %c0_i32_2 = arith.constant 0 : i32
    return %c0_i32, %c0_i32_0, %c0_i32_1 : i32, i32, i32
  }
  func.func @transform_4(%arg0: i32) -> (i32, i32, i32) {
    %c0_i32 = arith.constant 0 : i32
    %c0_i32_0 = arith.constant 0 : i32
    %c0_i32_1 = arith.constant 0 : i32
    %c0_i32_2 = arith.constant 0 : i32
    return %c0_i32, %c0_i32_0, %c0_i32_1 : i32, i32, i32
  }
  func.func @transform_5(%arg0: i32) -> (i32, i32) {
    %c0_i32 = arith.constant 0 : i32
    %c0_i32_0 = arith.constant 0 : i32
    %c0_i32_1 = arith.constant 0 : i32
    return %c0_i32, %c0_i32_0 : i32, i32
  }
  func.func @transform_6(%arg0: i32) -> (i32, i32) {
    %c0_i32 = arith.constant 0 : i32
    %c0_i32_0 = arith.constant 0 : i32
    %c0_i32_1 = arith.constant 0 : i32
    return %c0_i32, %c0_i32_0 : i32, i32
  }
  func.func @transform_7(%arg0: i32) -> (i32, i32, i32) {
    %c0_i32 = arith.constant 0 : i32
    %c0_i32_0 = arith.constant 0 : i32
    %c0_i32_1 = arith.constant 0 : i32
    return %arg0, %c0_i32, %c0_i32_0 : i32, i32, i32
  }
}

module attributes {stable_mosaic.version = 11 : i64} {
  func.func @tcn_fused_kernel(%arg0: i32, %arg1: memref<2x16x128xf32, #tpu.memory_space<vmem>>, %arg2: memref<2x2x256x128xbf16, #tpu.memory_space<vmem>>, %arg3: memref<2x2x1x128xf32, #tpu.memory_space<vmem>>, %arg4: memref<1x128x128xbf16, #tpu.memory_space<vmem>>, %arg5: memref<1x1x128xf32, #tpu.memory_space<vmem>>, %arg6: memref<128x128xbf16, #tpu.memory_space<vmem>>, %arg7: memref<1x128xf32, #tpu.memory_space<vmem>>, %arg8: memref<2x1x128xf32, #tpu.memory_space<vmem>>) attributes {dimension_semantics = [#tpu.dimension_semantics<parallel>], iteration_bounds = array<i64: 1>, scalar_prefetch = 0 : i64, scratch_operands = 0 : i64, tpu.core_type = #tpu.core_type<tc>, window_params = [{transform_indices = @transform_0, window_bounds = array<i64: 2, 16, 128>}, {pipeline_mode = #tpu.pipeline_mode<synchronous>, transform_indices = @transform_1, window_bounds = array<i64: 2, 2, 256, 128>}, {pipeline_mode = #tpu.pipeline_mode<synchronous>, transform_indices = @transform_2, window_bounds = array<i64: 2, 2, 1, 128>}, {pipeline_mode = #tpu.pipeline_mode<synchronous>, transform_indices = @transform_3, window_bounds = array<i64: 1, 128, 128>}, {pipeline_mode = #tpu.pipeline_mode<synchronous>, transform_indices = @transform_4, window_bounds = array<i64: 1, 1, 128>}, {pipeline_mode = #tpu.pipeline_mode<synchronous>, transform_indices = @transform_5, window_bounds = array<i64: 128, 128>}, {pipeline_mode = #tpu.pipeline_mode<synchronous>, transform_indices = @transform_6, window_bounds = array<i64: 1, 128>}, {transform_indices = @transform_7, window_bounds = array<i64: 2, 1, 128>}]} {
    %c0 = arith.constant 0 : index
    %c0_0 = arith.constant 0 : index
    %c0_1 = arith.constant 0 : index
    %0 = vector.load %arg1[%c0, %c0_0, %c0_1] : memref<2x16x128xf32, #tpu.memory_space<vmem>>, vector<2x16x128xf32>
    %1 = vector.shape_cast %0 : vector<2x16x128xf32> to vector<32x128xf32>
    %2 = tpu.iota {dimensions = array<i32: 0>} : vector<32x1xi32>
    %c16_i32 = arith.constant 16 : i32
    %c0_i32 = arith.constant 0 : i32
    %3 = arith.cmpi eq, %c16_i32, %c0_i32 : i32
    %c1_i32 = arith.constant 1 : i32
    %4 = arith.select %3, %c1_i32, %c16_i32 : i32
    %5 = vector.broadcast %4 : i32 to vector<32x1xi32>
    %6 = arith.remsi %2, %5 : vector<32x1xi32>
    %c0_i32_2 = arith.constant 0 : i32
    %7 = vector.broadcast %c0_i32_2 : i32 to vector<32x1xi32>
    %8 = arith.cmpi ne, %6, %7 : vector<32x1xi32>
    %c0_i32_3 = arith.constant 0 : i32
    %9 = vector.broadcast %c0_i32_3 : i32 to vector<32x1xi32>
    %10 = arith.cmpi slt, %6, %9 : vector<32x1xi32>
    %c0_i32_4 = arith.constant 0 : i32
    %11 = arith.cmpi slt, %4, %c0_i32_4 : i32
    %12 = vector.broadcast %11 : i1 to vector<32x1xi1>
    %13 = vector.broadcast %12 : vector<32x1xi1> to vector<32x1xi1>
    %14 = arith.xori %10, %13 : vector<32x1xi1>
    %15 = arith.andi %14, %8 : vector<32x1xi1>
    %16 = vector.broadcast %4 : i32 to vector<32x1xi32>
    %17 = arith.addi %6, %16 : vector<32x1xi32>
    %18 = arith.select %15, %17, %6 : vector<32x1xi1>, vector<32x1xi32>
    %c1_i32_5 = arith.constant 1 : i32
    %19 = vector.broadcast %c1_i32_5 : i32 to vector<32x1xi32>
    %20 = arith.cmpi sge, %18, %19 : vector<32x1xi32>
    %21 = vector.shape_cast %20 : vector<32x1xi1> to vector<32x1xi1>
    %22 = vector.broadcast %21 : vector<32x1xi1> to vector<32x128xi1>
    %c0_6 = arith.constant 0 : index
    %c0_7 = arith.constant 0 : index
    %c0_8 = arith.constant 0 : index
    %c0_9 = arith.constant 0 : index
    %23 = vector.load %arg2[%c0_6, %c0_7, %c0_8, %c0_9] : memref<2x2x256x128xbf16, #tpu.memory_space<vmem>>, vector<1x1x256x128xbf16>
    %24 = vector.shape_cast %23 : vector<1x1x256x128xbf16> to vector<256x128xbf16>
    %c0_10 = arith.constant 0 : index
    %c0_11 = arith.constant 0 : index
    %c0_12 = arith.constant 0 : index
    %c0_13 = arith.constant 0 : index
    %25 = vector.load %arg3[%c0_10, %c0_11, %c0_12, %c0_13] : memref<2x2x1x128xf32, #tpu.memory_space<vmem>>, vector<1x1x1x128xf32>
    %26 = vector.shape_cast %25 : vector<1x1x1x128xf32> to vector<1x128xf32>
    %c1_i32_14 = arith.constant 1 : i32
    %27 = tpu.dynamic_rotate %1 by %c1_i32_14 dim 0 : vector<32x128xf32>, i32 -> vector<32x128xf32>
    %cst = arith.constant 0.000000e+00 : f32
    %28 = vector.broadcast %cst : f32 to vector<32x128xf32>
    %29 = arith.select %22, %27, %28 : vector<32x128xi1>, vector<32x128xf32>
    %30 = tpu.concatenate %29, %1 in 1 : vector<32x128xf32>, vector<32x128xf32> -> vector<32x256xf32>
    %31 = arith.truncf %30 : vector<32x256xf32> to vector<32x256xbf16>
    %cst_15 = arith.constant dense<0.000000e+00> : vector<32x128xf32>
    %32 = tpu.matmul %31, %24, %cst_15 {dimension_numbers = #tpu.dot_dimension_numbers<[1], [0], [0], [1], [0, 0, 1, 1], [], []>} : vector<32x256xbf16>, vector<256x128xbf16>, vector<32x128xf32> -> vector<32x128xf32>
    %33 = vector.broadcast %26 : vector<1x128xf32> to vector<32x128xf32>
    %34 = arith.addf %32, %33 : vector<32x128xf32>
    %cst_16 = arith.constant 0.000000e+00 : f32
    %35 = vector.broadcast %cst_16 : f32 to vector<32x128xf32>
    %36 = arith.maximumf %34, %35 : vector<32x128xf32>
    %c0_17 = arith.constant 0 : index
    %c1 = arith.constant 1 : index
    %c0_18 = arith.constant 0 : index
    %c0_19 = arith.constant 0 : index
    %37 = vector.load %arg2[%c0_17, %c1, %c0_18, %c0_19] : memref<2x2x256x128xbf16, #tpu.memory_space<vmem>>, vector<1x1x256x128xbf16>
    %38 = vector.shape_cast %37 : vector<1x1x256x128xbf16> to vector<256x128xbf16>
    %c0_20 = arith.constant 0 : index
    %c1_21 = arith.constant 1 : index
    %c0_22 = arith.constant 0 : index
    %c0_23 = arith.constant 0 : index
    %39 = vector.load %arg3[%c0_20, %c1_21, %c0_22, %c0_23] : memref<2x2x1x128xf32, #tpu.memory_space<vmem>>, vector<1x1x1x128xf32>
    %40 = vector.shape_cast %39 : vector<1x1x1x128xf32> to vector<1x128xf32>
    %c1_i32_24 = arith.constant 1 : i32
    %41 = tpu.dynamic_rotate %36 by %c1_i32_24 dim 0 : vector<32x128xf32>, i32 -> vector<32x128xf32>
    %cst_25 = arith.constant 0.000000e+00 : f32
    %42 = vector.broadcast %cst_25 : f32 to vector<32x128xf32>
    %43 = arith.select %22, %41, %42 : vector<32x128xi1>, vector<32x128xf32>
    %44 = tpu.concatenate %43, %36 in 1 : vector<32x128xf32>, vector<32x128xf32> -> vector<32x256xf32>
    %45 = arith.truncf %44 : vector<32x256xf32> to vector<32x256xbf16>
    %cst_26 = arith.constant dense<0.000000e+00> : vector<32x128xf32>
    %46 = tpu.matmul %45, %38, %cst_26 {dimension_numbers = #tpu.dot_dimension_numbers<[1], [0], [0], [1], [0, 0, 1, 1], [], []>} : vector<32x256xbf16>, vector<256x128xbf16>, vector<32x128xf32> -> vector<32x128xf32>
    %47 = vector.broadcast %40 : vector<1x128xf32> to vector<32x128xf32>
    %48 = arith.addf %46, %47 : vector<32x128xf32>
    %cst_27 = arith.constant 0.000000e+00 : f32
    %49 = vector.broadcast %cst_27 : f32 to vector<32x128xf32>
    %50 = arith.maximumf %48, %49 : vector<32x128xf32>
    %51 = arith.truncf %1 : vector<32x128xf32> to vector<32x128xbf16>
    %c0_28 = arith.constant 0 : index
    %c0_29 = arith.constant 0 : index
    %c0_30 = arith.constant 0 : index
    %52 = vector.load %arg4[%c0_28, %c0_29, %c0_30] : memref<1x128x128xbf16, #tpu.memory_space<vmem>>, vector<1x128x128xbf16>
    %53 = vector.shape_cast %52 : vector<1x128x128xbf16> to vector<128x128xbf16>
    %cst_31 = arith.constant dense<0.000000e+00> : vector<32x128xf32>
    %54 = tpu.matmul %51, %53, %cst_31 {dimension_numbers = #tpu.dot_dimension_numbers<[1], [0], [0], [1], [0, 0, 1, 1], [], []>} : vector<32x128xbf16>, vector<128x128xbf16>, vector<32x128xf32> -> vector<32x128xf32>
    %c0_32 = arith.constant 0 : index
    %c0_33 = arith.constant 0 : index
    %c0_34 = arith.constant 0 : index
    %55 = vector.load %arg5[%c0_32, %c0_33, %c0_34] : memref<1x1x128xf32, #tpu.memory_space<vmem>>, vector<1x1x128xf32>
    %56 = vector.shape_cast %55 : vector<1x1x128xf32> to vector<1x128xf32>
    %57 = vector.broadcast %56 : vector<1x128xf32> to vector<32x128xf32>
    %58 = arith.addf %54, %57 : vector<32x128xf32>
    %59 = arith.addf %50, %58 : vector<32x128xf32>
    %cst_35 = arith.constant 0.000000e+00 : f32
    %60 = vector.broadcast %cst_35 : f32 to vector<32x128xf32>
    %61 = arith.maximumf %59, %60 : vector<32x128xf32>
    %c2_i32 = arith.constant 2 : i32
    %62 = vector.broadcast %c2_i32 : i32 to vector<32x1xi32>
    %63 = arith.cmpi sge, %18, %62 : vector<32x1xi32>
    %64 = vector.shape_cast %63 : vector<32x1xi1> to vector<32x1xi1>
    %65 = vector.broadcast %64 : vector<32x1xi1> to vector<32x128xi1>
    %c1_36 = arith.constant 1 : index
    %c0_37 = arith.constant 0 : index
    %c0_38 = arith.constant 0 : index
    %c0_39 = arith.constant 0 : index
    %66 = vector.load %arg2[%c1_36, %c0_37, %c0_38, %c0_39] : memref<2x2x256x128xbf16, #tpu.memory_space<vmem>>, vector<1x1x256x128xbf16>
    %67 = vector.shape_cast %66 : vector<1x1x256x128xbf16> to vector<256x128xbf16>
    %c1_40 = arith.constant 1 : index
    %c0_41 = arith.constant 0 : index
    %c0_42 = arith.constant 0 : index
    %c0_43 = arith.constant 0 : index
    %68 = vector.load %arg3[%c1_40, %c0_41, %c0_42, %c0_43] : memref<2x2x1x128xf32, #tpu.memory_space<vmem>>, vector<1x1x1x128xf32>
    %69 = vector.shape_cast %68 : vector<1x1x1x128xf32> to vector<1x128xf32>
    %c2_i32_44 = arith.constant 2 : i32
    %70 = tpu.dynamic_rotate %61 by %c2_i32_44 dim 0 : vector<32x128xf32>, i32 -> vector<32x128xf32>
    %cst_45 = arith.constant 0.000000e+00 : f32
    %71 = vector.broadcast %cst_45 : f32 to vector<32x128xf32>
    %72 = arith.select %65, %70, %71 : vector<32x128xi1>, vector<32x128xf32>
    %73 = tpu.concatenate %72, %61 in 1 : vector<32x128xf32>, vector<32x128xf32> -> vector<32x256xf32>
    %74 = arith.truncf %73 : vector<32x256xf32> to vector<32x256xbf16>
    %cst_46 = arith.constant dense<0.000000e+00> : vector<32x128xf32>
    %75 = tpu.matmul %74, %67, %cst_46 {dimension_numbers = #tpu.dot_dimension_numbers<[1], [0], [0], [1], [0, 0, 1, 1], [], []>} : vector<32x256xbf16>, vector<256x128xbf16>, vector<32x128xf32> -> vector<32x128xf32>
    %76 = vector.broadcast %69 : vector<1x128xf32> to vector<32x128xf32>
    %77 = arith.addf %75, %76 : vector<32x128xf32>
    %cst_47 = arith.constant 0.000000e+00 : f32
    %78 = vector.broadcast %cst_47 : f32 to vector<32x128xf32>
    %79 = arith.maximumf %77, %78 : vector<32x128xf32>
    %c1_48 = arith.constant 1 : index
    %c1_49 = arith.constant 1 : index
    %c0_50 = arith.constant 0 : index
    %c0_51 = arith.constant 0 : index
    %80 = vector.load %arg2[%c1_48, %c1_49, %c0_50, %c0_51] : memref<2x2x256x128xbf16, #tpu.memory_space<vmem>>, vector<1x1x256x128xbf16>
    %81 = vector.shape_cast %80 : vector<1x1x256x128xbf16> to vector<256x128xbf16>
    %c1_52 = arith.constant 1 : index
    %c1_53 = arith.constant 1 : index
    %c0_54 = arith.constant 0 : index
    %c0_55 = arith.constant 0 : index
    %82 = vector.load %arg3[%c1_52, %c1_53, %c0_54, %c0_55] : memref<2x2x1x128xf32, #tpu.memory_space<vmem>>, vector<1x1x1x128xf32>
    %83 = vector.shape_cast %82 : vector<1x1x1x128xf32> to vector<1x128xf32>
    %c2_i32_56 = arith.constant 2 : i32
    %84 = tpu.dynamic_rotate %79 by %c2_i32_56 dim 0 : vector<32x128xf32>, i32 -> vector<32x128xf32>
    %cst_57 = arith.constant 0.000000e+00 : f32
    %85 = vector.broadcast %cst_57 : f32 to vector<32x128xf32>
    %86 = arith.select %65, %84, %85 : vector<32x128xi1>, vector<32x128xf32>
    %87 = tpu.concatenate %86, %79 in 1 : vector<32x128xf32>, vector<32x128xf32> -> vector<32x256xf32>
    %88 = arith.truncf %87 : vector<32x256xf32> to vector<32x256xbf16>
    %cst_58 = arith.constant dense<0.000000e+00> : vector<32x128xf32>
    %89 = tpu.matmul %88, %81, %cst_58 {dimension_numbers = #tpu.dot_dimension_numbers<[1], [0], [0], [1], [0, 0, 1, 1], [], []>} : vector<32x256xbf16>, vector<256x128xbf16>, vector<32x128xf32> -> vector<32x128xf32>
    %90 = vector.broadcast %83 : vector<1x128xf32> to vector<32x128xf32>
    %91 = arith.addf %89, %90 : vector<32x128xf32>
    %cst_59 = arith.constant 0.000000e+00 : f32
    %92 = vector.broadcast %cst_59 : f32 to vector<32x128xf32>
    %93 = arith.maximumf %91, %92 : vector<32x128xf32>
    %94 = arith.addf %93, %61 : vector<32x128xf32>
    %cst_60 = arith.constant 0.000000e+00 : f32
    %95 = vector.broadcast %cst_60 : f32 to vector<32x128xf32>
    %96 = arith.maximumf %94, %95 : vector<32x128xf32>
    %97 = vector.shape_cast %96 : vector<32x128xf32> to vector<2x16x128xf32>
    %98 = vector.extract_strided_slice %97 {offsets = [0, 15, 0], sizes = [2, 1, 128], strides = [1, 1, 1]} : vector<2x16x128xf32> to vector<2x1x128xf32>
    %99 = vector.shape_cast %98 : vector<2x1x128xf32> to vector<2x128xf32>
    %100 = arith.truncf %99 : vector<2x128xf32> to vector<2x128xbf16>
    %c0_61 = arith.constant 0 : index
    %c0_62 = arith.constant 0 : index
    %101 = vector.load %arg6[%c0_61, %c0_62] : memref<128x128xbf16, #tpu.memory_space<vmem>>, vector<128x128xbf16>
    %cst_63 = arith.constant dense<0.000000e+00> : vector<2x128xf32>
    %102 = tpu.matmul %100, %101, %cst_63 {dimension_numbers = #tpu.dot_dimension_numbers<[1], [0], [0], [1], [0, 0, 1, 1], [], []>} : vector<2x128xbf16>, vector<128x128xbf16>, vector<2x128xf32> -> vector<2x128xf32>
    %c0_64 = arith.constant 0 : index
    %c0_65 = arith.constant 0 : index
    %103 = vector.load %arg7[%c0_64, %c0_65] : memref<1x128xf32, #tpu.memory_space<vmem>>, vector<1x128xf32>
    %104 = vector.broadcast %103 : vector<1x128xf32> to vector<2x128xf32>
    %105 = arith.addf %102, %104 : vector<2x128xf32>
    %c0_66 = arith.constant 0 : index
    %c0_67 = arith.constant 0 : index
    %c0_68 = arith.constant 0 : index
    %106 = vector.load %arg8[%c0_66, %c0_67, %c0_68] : memref<2x1x128xf32, #tpu.memory_space<vmem>>, vector<2x1x128xf32>
    %107 = vector.shape_cast %106 : vector<2x1x128xf32> to vector<2x128xf32>
    %108 = vector.shape_cast %105 : vector<2x128xf32> to vector<2x1x128xf32>
    tpu.vector_store %arg8[%c0_66, %c0_67, %c0_68], %108 {strides = array<i32>} : memref<2x1x128xf32, #tpu.memory_space<vmem>>, vector<2x1x128xf32>,
    return
  }
  func.func @transform_0(%arg0: i32) -> (i32, i32, i32) {
    %c0_i32 = arith.constant 0 : i32
    %c0_i32_0 = arith.constant 0 : i32
    %c0_i32_1 = arith.constant 0 : i32
    return %arg0, %c0_i32, %c0_i32_0 : i32, i32, i32
  }
  func.func @transform_1(%arg0: i32) -> (i32, i32, i32, i32) {
    %c0_i32 = arith.constant 0 : i32
    %c0_i32_0 = arith.constant 0 : i32
    %c0_i32_1 = arith.constant 0 : i32
    %c0_i32_2 = arith.constant 0 : i32
    %c0_i32_3 = arith.constant 0 : i32
    return %c0_i32, %c0_i32_0, %c0_i32_1, %c0_i32_2 : i32, i32, i32, i32
  }
  func.func @transform_2(%arg0: i32) -> (i32, i32, i32, i32) {
    %c0_i32 = arith.constant 0 : i32
    %c0_i32_0 = arith.constant 0 : i32
    %c0_i32_1 = arith.constant 0 : i32
    %c0_i32_2 = arith.constant 0 : i32
    %c0_i32_3 = arith.constant 0 : i32
    return %c0_i32, %c0_i32_0, %c0_i32_1, %c0_i32_2 : i32, i32, i32, i32
  }
  func.func @transform_3(%arg0: i32) -> (i32, i32, i32) {
    %c0_i32 = arith.constant 0 : i32
    %c0_i32_0 = arith.constant 0 : i32
    %c0_i32_1 = arith.constant 0 : i32
    %c0_i32_2 = arith.constant 0 : i32
    return %c0_i32, %c0_i32_0, %c0_i32_1 : i32, i32, i32
  }
  func.func @transform_4(%arg0: i32) -> (i32, i32, i32) {
    %c0_i32 = arith.constant 0 : i32
    %c0_i32_0 = arith.constant 0 : i32
    %c0_i32_1 = arith.constant 0 : i32
    %c0_i32_2 = arith.constant 0 : i32
    return %c0_i32, %c0_i32_0, %c0_i32_1 : i32, i32, i32
  }
  func.func @transform_5(%arg0: i32) -> (i32, i32) {
    %c0_i32 = arith.constant 0 : i32
    %c0_i32_0 = arith.constant 0 : i32
    %c0_i32_1 = arith.constant 0 : i32
    return %c0_i32, %c0_i32_0 : i32, i32
  }
  func.func @transform_6(%arg0: i32) -> (i32, i32) {
    %c0_i32 = arith.constant 0 : i32
    %c0_i32_0 = arith.constant 0 : i32
    %c0_i32_1 = arith.constant 0 : i32
    return %c0_i32, %c0_i32_0 : i32, i32
  }
  func.func @transform_7(%arg0: i32) -> (i32, i32, i32) {
    %c0_i32 = arith.constant 0 : i32
    %c0_i32_0 = arith.constant 0 : i32
    %c0_i32_1 = arith.constant 0 : i32
    return %arg0, %c0_i32, %c0_i32_0 : i32, i32, i32
  }
}

</mosaic_0001>

<llo_original>
// kernel: tpu_custom_call.1
$region0: #{tpu_custom_call.1}
  #allocation0 [shape = 'u32[]', space=smem, size = 0x4, offset = 0x4, fixed_abs, tag = 'smem constant byte address 0x4 - core index']
  #allocation1 [shape = 'u32[72,128]{1,0:T(1,128)}', space=vmem, size = 0x9000, scoped, tag = 'internal scratch']
  %s0 = inlined_call_operand.hbm [shape: f32[2,16,128], index: 0, kind: input, shape index: {}]
  %s1 = inlined_call_operand.hbm [shape: bf16[2,2,256,128], index: 1, kind: input, shape index: {}]
  %s2 = inlined_call_operand.hbm [shape: f32[2,2,1,128], index: 2, kind: input, shape index: {}]
  %s3 = inlined_call_operand.hbm [shape: bf16[1,128,128], index: 3, kind: input, shape index: {}]
  %s4 = inlined_call_operand.vmem [shape: f32[1,1,128], index: 4, kind: input, shape index: {}]
  %s5 = inlined_call_operand.hbm [shape: bf16[128,128], index: 5, kind: input, shape index: {}]
  %s6 = inlined_call_operand.vmem [shape: f32[1,128], index: 6, kind: input, shape index: {}]
  %s7 = inlined_call_operand.hbm [shape: f32[2,1,128], index: 7, kind: output, shape index: {}]
  %s8 = sld [smem:[#allocation0]]
  $region58: #{tpu_custom_call.1} parent=0
    _
  %s10 = ssub.s32 1, %s8
  %s11 = scalar_select 0, %s10, %s8
  $region1: #{tpu_custom_call.1} parent=0
    #allocation2 [shape = 'u8[16384]{0}', space=vmem, size = 0x4000, scoped, tag = 'input window, operand 0, single buffered']
    #allocation3 [shape = 's32[1]{0}', space=sflag, size = 0x4, scoped, tag = 'scoped memory for tpu_custom_call.1']
    #allocation4 [shape = 's32[1]{0}', space=sflag, size = 0x4, scoped, tag = 'scoped memory for tpu_custom_call.1']
    #allocation5 [shape = 'u8[262144]{0}', space=vmem, size = 0x40000, scoped, tag = 'input window, operand 1, single buffered']
    #allocation6 [shape = 's32[1]{0}', space=sflag, size = 0x4, scoped, tag = 'scoped memory for tpu_custom_call.1']
    #allocation7 [shape = 'u8[2048]{0}', space=vmem, size = 0x800, scoped, tag = 'input window, operand 2, single buffered']
    #allocation8 [shape = 'u8[32768]{0}', space=vmem, size = 0x8000, scoped, tag = 'input window, operand 3, single buffered']
    #allocation9 [shape = 's32[1]{0}', space=sflag, size = 0x4, scoped, tag = 'scoped memory for tpu_custom_call.1']
    #allocation10 [shape = 'u8[32768]{0}', space=vmem, size = 0x8000, scoped, tag = 'input window, operand 5, single buffered']
    #allocation11 [shape = 'u8[1024]{0}', space=vmem, size = 0x400, scoped, tag = 'output window, operand 0, single buffered']
    %12 = vsyncpa [#allocation3], 0
    %13 = vsyncpa [#allocation6], 0
    %14 = vsyncpa [#allocation9], 0
    %15 = vsyncpa [#allocation4], 0
    // Predicated region
    $region2: #{tpu_custom_call.1} parent=1 // pred_check
      _
    $region3: #{tpu_custom_call.1} parent=1 // pred_check_branch
      %17 = sbr.rel (0) target = $region5
    $region4: #{tpu_custom_call.1} parent=1 // pred_region
      %19 = vsyncadd [#allocation3], 0
      %s20 = sshll.u32 %s0, 4
      %s21 = int_to_ptr.hbm [resolvable:$true] %s20
      %s22 = sshll.u32 [#allocation2], 4
      %s23 = int_to_ptr.vmem [resolvable:$true] %s22
      %28 = dma.hbm_to_vmem [thread:$0]  %s21, 512, %s23, [#allocation3], 128, 128, 8
    $region5: #{tpu_custom_call.1} parent=1 // pred_fallthru
      _
    // Predicated region
    $region6: #{tpu_custom_call.1} parent=1 // pred_check
      _
    $region7: #{tpu_custom_call.1} parent=1 // pred_check_branch
      %30 = sbr.rel (0) target = $region9
    $region8: #{tpu_custom_call.1} parent=1 // pred_region
      %32 = vsyncadd [#allocation6], 0
      %s33 = sshll.u32 %s1, 4
      %s34 = int_to_ptr.hbm [resolvable:$true] %s33
      %s35 = sshll.u32 [#allocation5], 4
      %s36 = int_to_ptr.vmem [resolvable:$true] %s35
      %41 = dma.hbm_to_vmem [thread:$0]  %s34, 8192, %s36, [#allocation6], 64, 64, 4
    $region9: #{tpu_custom_call.1} parent=1 // pred_fallthru
      _
    // Predicated region
    $region10: #{tpu_custom_call.1} parent=1 // pred_check
      _
    $region11: #{tpu_custom_call.1} parent=1 // pred_check_branch
      %43 = sbr.rel (0) target = $region13
    $region12: #{tpu_custom_call.1} parent=1 // pred_region
      %45 = vsyncadd [#allocation6], 0
      %s46 = sshll.u32 %s2, 4
      %s47 = int_to_ptr.hbm [resolvable:$true] %s46
      %s48 = sshll.u32 [#allocation7], 4
      %s49 = int_to_ptr.vmem [resolvable:$true] %s48
      %54 = dma.hbm_to_vmem [thread:$0]  %s47, 64, %s49, [#allocation6], 16, 16, 1
    $region13: #{tpu_custom_call.1} parent=1 // pred_fallthru
      _
    // Predicated region
    $region14: #{tpu_custom_call.1} parent=1 // pred_check
      _
    $region15: #{tpu_custom_call.1} parent=1 // pred_check_branch
      %56 = sbr.rel (0) target = $region17
    $region16: #{tpu_custom_call.1} parent=1 // pred_region
      %58 = vsyncadd [#allocation9], 0
      %s59 = sshll.u32 %s3, 4
      %s60 = int_to_ptr.hbm [resolvable:$true] %s59
      %s61 = sshll.u32 [#allocation8], 4
      %s62 = int_to_ptr.vmem [resolvable:$true] %s61
      %67 = dma.hbm_to_vmem [thread:$0]  %s60, 1024, %s62, [#allocation9], 64, 64, 4
    $region17: #{tpu_custom_call.1} parent=1 // pred_fallthru
      _
    // Predicated region
    $region18: #{tpu_custom_call.1} parent=1 // pred_check
      _
    $region19: #{tpu_custom_call.1} parent=1 // pred_check_branch
      %69 = sbr.rel (0) target = $region21
    $region20: #{tpu_custom_call.1} parent=1 // pred_region
      _
    $region21: #{tpu_custom_call.1} parent=1 // pred_fallthru
      _
    // Predicated region
    $region22: #{tpu_custom_call.1} parent=1 // pred_check
      _
    $region23: #{tpu_custom_call.1} parent=1 // pred_check_branch
      %71 = sbr.rel (0) target = $region25
    $region24: #{tpu_custom_call.1} parent=1 // pred_region
      %73 = vsyncadd [#allocation9], 0
      %s74 = sshll.u32 %s5, 4
      %s75 = int_to_ptr.hbm [resolvable:$true] %s74
      %s76 = sshll.u32 [#allocation10], 4
      %s77 = int_to_ptr.vmem [resolvable:$true] %s76
      %82 = dma.hbm_to_vmem [thread:$0]  %s75, 1024, %s77, [#allocation9], 64, 64, 4
    $region25: #{tpu_custom_call.1} parent=1 // pred_fallthru
      _
    // Predicated region
    $region26: #{tpu_custom_call.1} parent=1 // pred_check
      _
    $region27: #{tpu_custom_call.1} parent=1 // pred_check_branch
      %84 = sbr.rel (0) target = $region29
    $region28: #{tpu_custom_call.1} parent=1 // pred_region
      _
    $region29: #{tpu_custom_call.1} parent=1 // pred_fallthru
      _
    // Predicated region
    $region30: #{tpu_custom_call.1} parent=1 // pred_check
      _
    $region31: #{tpu_custom_call.1} parent=1 // pred_check_branch
      %86 = sbr.rel (0) target = $region33
    $region32: #{tpu_custom_call.1} parent=1 // pred_region
      %88 = dma.done [#allocation3], 512
    $region33: #{tpu_custom_call.1} parent=1 // pred_fallthru
      _
    // Predicated region
    $region34: #{tpu_custom_call.1} parent=1 // pred_check
      _
    $region35: #{tpu_custom_call.1} parent=1 // pred_check_branch
      %90 = sbr.rel (0) target = $region37
    $region36: #{tpu_custom_call.1} parent=1 // pred_region
      %92 = dma.done [#allocation6], 8192
    $region37: #{tpu_custom_call.1} parent=1 // pred_fallthru
      _
    // Predicated region
    $region38: #{tpu_custom_call.1} parent=1 // pred_check
      _
    $region39: #{tpu_custom_call.1} parent=1 // pred_check_branch
      %94 = sbr.rel (0) target = $region41
    $region40: #{tpu_custom_call.1} parent=1 // pred_region
      %96 = dma.done [#allocation6], 64
    $region41: #{tpu_custom_call.1} parent=1 // pred_fallthru
      _
    // Predicated region
    $region42: #{tpu_custom_call.1} parent=1 // pred_check
      _
    $region43: #{tpu_custom_call.1} parent=1 // pred_check_branch
      %98 = sbr.rel (0) target = $region45
    $region44: #{tpu_custom_call.1} parent=1 // pred_region
      %100 = dma.done [#allocation9], 1024
    $region45: #{tpu_custom_call.1} parent=1 // pred_fallthru
      _
    // Predicated region
    $region46: #{tpu_custom_call.1} parent=1 // pred_check
      _
    $region47: #{tpu_custom_call.1} parent=1 // pred_check_branch
      %102 = sbr.rel (0) target = $region49
    $region48: #{tpu_custom_call.1} parent=1 // pred_region
      %104 = dma.done [#allocation9], 1024
    $region49: #{tpu_custom_call.1} parent=1 // pred_fallthru
      _
    %v105 = vld [vmem:[#allocation2] sm:$0xff]
    %v106 = vld [vmem:[#allocation2 + $0x8] sm:$0xff]
    %v107 = vld [vmem:[#allocation2 + $0x10] sm:$0xff]
    %v108 = vld [vmem:[#allocation2 + $0x18] sm:$0xff]
    %v109 = vlaneseq
    %v110 = vshrl.u32 %v109, 7
    %v111 = vadd.s32 %v110, 8
    %v112 = vadd.s32 %v110, 16
    %v113 = vadd.s32 %v110, 24
    %vm114 = vcmp.lt.s32.totalorder %v110, 0
    %v115 = vsub.s32 0, %v110
    %v116 = vsel %vm114, %v115, %v110
    %v117 = vshrl.u32 %v116, 4
    %v118 = vand.u32 %v116, 15
    %v119 = vsub.s32 0, %v118
    %v120 = vsel %vm114, %v119, %v118
    %vm121 = vcmp.lt.s32.totalorder %v111, 0
    %v122 = vsub.s32 0, %v111
    %v123 = vsel %vm121, %v122, %v111
    %v124 = vshrl.u32 %v123, 4
    %v125 = vand.u32 %v123, 15
    %v126 = vsub.s32 0, %v125
    %v127 = vsel %vm121, %v126, %v125
    %vm128 = vcmp.lt.s32.totalorder %v112, 0
    %v129 = vsub.s32 0, %v112
    %v130 = vsel %vm128, %v129, %v112
    %v131 = vshrl.u32 %v130, 4
    %v132 = vand.u32 %v130, 15
    %v133 = vsub.s32 0, %v132
    %v134 = vsel %vm128, %v133, %v132
    %vm135 = vcmp.lt.s32.totalorder %v113, 0
    %v136 = vsub.s32 0, %v113
    %v137 = vsel %vm135, %v136, %v113
    %v138 = vshrl.u32 %v137, 4
    %v139 = vand.u32 %v137, 15
    %v140 = vsub.s32 0, %v139
    %v141 = vsel %vm135, %v140, %v139
    %vm142 = vcmp.ne.s32.totalorder %v120, 0
    %vm143 = vcmp.ne.s32.totalorder %v127, 0
    %vm144 = vcmp.ne.s32.totalorder %v134, 0
    %vm145 = vcmp.ne.s32.totalorder %v141, 0
    %vm146 = vcmp.lt.s32.totalorder %v120, 0
    %vm147 = vcmp.lt.s32.totalorder %v127, 0
    %vm148 = vcmp.lt.s32.totalorder %v134, 0
    %vm149 = vcmp.lt.s32.totalorder %v141, 0
    %vm150 = vmand %vm146, %vm142
    %vm151 = vmand %vm147, %vm143
    %vm152 = vmand %vm148, %vm144
    %vm153 = vmand %vm149, %vm145
    %v154 = vadd.s32 %v120, 16
    %v155 = vadd.s32 %v127, 16
    %v156 = vadd.s32 %v134, 16
    %v157 = vadd.s32 %v141, 16
    %v158 = vsel %vm150, %v154, %v120
    %v159 = vsel %vm151, %v155, %v127
    %v160 = vsel %vm152, %v156, %v134
    %v161 = vsel %vm153, %v157, %v141
    %vm162 = vcmp.ge.s32.totalorder %v158, 1
    %vm163 = vcmp.ge.s32.totalorder %v159, 1
    %vm164 = vcmp.ge.s32.totalorder %v160, 1
    %vm165 = vcmp.ge.s32.totalorder %v161, 1
    %v166 = vsel %vm162, 1, 0
    %v167 = vsel %vm163, 1, 0
    %v168 = vsel %vm164, 1, 0
    %v169 = vsel %vm165, 1, 0
    %vm170 = vcmp.eq.s32.totalorder %v166, 1
    %vm171 = vcmp.eq.s32.totalorder %v167, 1
    %vm172 = vcmp.eq.s32.totalorder %v168, 1
    %vm173 = vcmp.eq.s32.totalorder %v169, 1
    %v174 = vld [vmem:[#allocation5] sm:$0xf]
    %v175 = vld [vmem:[#allocation5 + $0x4] sm:$0xf]
    %v176 = vld [vmem:[#allocation5 + $0x8] sm:$0xf]
    %v177 = vld [vmem:[#allocation5 + $0xc] sm:$0xf]
    %v178 = vld [vmem:[#allocation5 + $0x10] sm:$0xf]
    %v179 = vld [vmem:[#allocation5 + $0x14] sm:$0xf]
    %v180 = vld [vmem:[#allocation5 + $0x18] sm:$0xf]
    %v181 = vld [vmem:[#allocation5 + $0x1c] sm:$0xf]
    %v182 = vld [vmem:[#allocation5 + $0x20] sm:$0xf]
    %v183 = vld [vmem:[#allocation5 + $0x24] sm:$0xf]
    %v184 = vld [vmem:[#allocation5 + $0x28] sm:$0xf]
    %v185 = vld [vmem:[#allocation5 + $0x2c] sm:$0xf]
    %v186 = vld [vmem:[#allocation5 + $0x30] sm:$0xf]
    %v187 = vld [vmem:[#allocation5 + $0x34] sm:$0xf]
    %v188 = vld [vmem:[#allocation5 + $0x38] sm:$0xf]
    %v189 = vld [vmem:[#allocation5 + $0x3c] sm:$0xf]
    %v190 = vld [vmem:[#allocation5 + $0x40] sm:$0xf]
    %v191 = vld [vmem:[#allocation5 + $0x44] sm:$0xf]
    %v192 = vld [vmem:[#allocation5 + $0x48] sm:$0xf]
    %v193 = vld [vmem:[#allocation5 + $0x4c] sm:$0xf]
    %v194 = vld [vmem:[#allocation5 + $0x50] sm:$0xf]
    %v195 = vld [vmem:[#allocation5 + $0x54] sm:$0xf]
    %v196 = vld [vmem:[#allocation5 + $0x58] sm:$0xf]
    %v197 = vld [vmem:[#allocation5 + $0x5c] sm:$0xf]
    %v198 = vld [vmem:[#allocation5 + $0x60] sm:$0xf]
    %v199 = vld [vmem:[#allocation5 + $0x64] sm:$0xf]
    %v200 = vld [vmem:[#allocation5 + $0x68] sm:$0xf]
    %v201 = vld [vmem:[#allocation5 + $0x6c] sm:$0xf]
    %v202 = vld [vmem:[#allocation5 + $0x70] sm:$0xf]
    %v203 = vld [vmem:[#allocation5 + $0x74] sm:$0xf]
    %v204 = vld [vmem:[#allocation5 + $0x78] sm:$0xf]
    %v205 = vld [vmem:[#allocation5 + $0x7c] sm:$0xf]
    %v206 = vld [vmem:[#allocation7] sm:$0x1]
    %v207 = vrot.slane %v105, 7
    %v208 = vrot.slane %v106, 7
    %v209 = vrot.slane %v107, 7
    %v210 = vrot.slane %v108, 7
    %vm211 = vcmp.lt.s32.totalorder %v110, 1
    %v212 = vsel %vm211, %v209, %v210
    %v213 = vsel %vm211, %v208, %v209
    %v214 = vsel %vm211, %v207, %v208
    %v215 = vsel %vm211, %v210, %v207
    %v216 = vsel %vm170, %v215, 0.0
    %v217 = vsel %vm171, %v214, 0.0
    %v218 = vsel %vm172, %v213, 0.0
    %v219 = vsel %vm173, %v212, 0.0
    %v220 = vpack.c.bf16 %v217, %v216
    %v221 = vpack.c.bf16 %v106, %v105
    %v222 = vpack.c.bf16 %v219, %v218
    %v223 = vpack.c.bf16 %v108, %v107
    %v225 = vperm.slane %v206, 0
    %v259 = vunpack.c.l.b16 %v174
    %v260 = vunpack.c.l.b16 %v175
    %v261 = vunpack.c.l.b16 %v176
    %v262 = vunpack.c.l.b16 %v177
    %v263 = vunpack.c.l.b16 %v178
    %v264 = vunpack.c.l.b16 %v179
    %v265 = vunpack.c.l.b16 %v180
    %v266 = vunpack.c.l.b16 %v181
    %v267 = vunpack.c.l.b16 %v182
    %v268 = vunpack.c.l.b16 %v183
    %v269 = vunpack.c.l.b16 %v184
    %v270 = vunpack.c.l.b16 %v185
    %v271 = vunpack.c.l.b16 %v186
    %v272 = vunpack.c.l.b16 %v187
    %v273 = vunpack.c.l.b16 %v188
    %v274 = vunpack.c.l.b16 %v189
    %v275 = vunpack.c.l.b16 %v190
    %v276 = vunpack.c.l.b16 %v191
    %v277 = vunpack.c.l.b16 %v192
    %v278 = vunpack.c.l.b16 %v193
    %v279 = vunpack.c.l.b16 %v194
    %v280 = vunpack.c.l.b16 %v195
    %v281 = vunpack.c.l.b16 %v196
    %v282 = vunpack.c.l.b16 %v197
    %v283 = vunpack.c.l.b16 %v198
    %v284 = vunpack.c.l.b16 %v199
    %v285 = vunpack.c.l.b16 %v200
    %v286 = vunpack.c.l.b16 %v201
    %v287 = vunpack.c.l.b16 %v202
    %v288 = vunpack.c.l.b16 %v203
    %v289 = vunpack.c.l.b16 %v204
    %v290 = vunpack.c.l.b16 %v205
    %v291 = vpack.c.b16 %v260, %v259
    %v292 = vpack.c.b16 %v262, %v261
    %v293 = vpack.c.b16 %v264, %v263
    %v294 = vpack.c.b16 %v266, %v265
    %v295 = vpack.c.b16 %v268, %v267
    %v296 = vpack.c.b16 %v270, %v269
    %v297 = vpack.c.b16 %v272, %v271
    %v298 = vpack.c.b16 %v274, %v273
    %v299 = vpack.c.b16 %v276, %v275
    %v300 = vpack.c.b16 %v278, %v277
    %v301 = vpack.c.b16 %v280, %v279
    %v302 = vpack.c.b16 %v282, %v281
    %v303 = vpack.c.b16 %v284, %v283
    %v304 = vpack.c.b16 %v286, %v285
    %v305 = vpack.c.b16 %v288, %v287
    %v306 = vpack.c.b16 %v290, %v289
    %323 = vmatpush.bf16.msra.mxu0 %v298
    %324 = vmatpush.bf16.msra.mxu0 %v297
    %325 = vmatpush.bf16.msra.mxu0 %v296
    %326 = vmatpush.bf16.msra.mxu0 %v295
    %327 = vmatpush.bf16.msra.mxu0 %v294
    %328 = vmatpush.bf16.msra.mxu0 %v293
    %329 = vmatpush.bf16.msra.mxu0 %v292
    %330 = vmatpush.bf16.msra.mxu0 %v291
    %331 = vmatmul.bf16.gmra.mxu0 %v220
    %v332 = vpop.f32.mrf.mxu0
    %v333 = vadd.f32 %v225, %v332
    %v334 = vpop.f32.mrf.mxu0
    %v335 = vadd.f32 %v225, %v334
    %336 = vmatmul.bf16.gmra.mxu0 %v222
    %v337 = vpop.f32.mrf.mxu0
    %v338 = vadd.f32 %v225, %v337
    %v339 = vpop.f32.mrf.mxu0
    %v340 = vadd.f32 %v225, %v339
    %341 = vdwg.mxu0
    %342 = vmatpush.bf16.msra.mxu0 %v306
    %343 = vmatpush.bf16.msra.mxu0 %v305
    %344 = vmatpush.bf16.msra.mxu0 %v304
    %345 = vmatpush.bf16.msra.mxu0 %v303
    %346 = vmatpush.bf16.msra.mxu0 %v302
    %347 = vmatpush.bf16.msra.mxu0 %v301
    %348 = vmatpush.bf16.msra.mxu0 %v300
    %349 = vmatpush.bf16.msra.mxu0 %v299
    %350 = vmatmul.bf16.gmra.mxu0 %v221
    %v351 = vpop.f32.mrf.mxu0
    %v352 = vadd.f32 %v333, %v351
    %v353 = vpop.f32.mrf.mxu0
    %v354 = vadd.f32 %v335, %v353
    %355 = vmatmul.bf16.gmra.mxu0 %v223
    %v356 = vpop.f32.mrf.mxu0
    %v357 = vadd.f32 %v338, %v356
    %v358 = vpop.f32.mrf.mxu0
    %v359 = vadd.f32 %v340, %v358
    %360 = vdwg.mxu0
    %v361 = vmax.f32 %v352, 0.0
    %v362 = vmax.f32 %v354, 0.0
    %v363 = vmax.f32 %v357, 0.0
    %v364 = vmax.f32 %v359, 0.0
    %s365 = scalar_lea.vmem [#allocation5], 128
    %v366 = vld [vmem:[%s365] sm:$0xf]
    %v367 = vld [vmem:[%s365 + $0x4] sm:$0xf]
    %v368 = vld [vmem:[%s365 + $0x8] sm:$0xf]
    %v369 = vld [vmem:[%s365 + $0xc] sm:$0xf]
    %v370 = vld [vmem:[%s365 + $0x10] sm:$0xf]
    %v371 = vld [vmem:[%s365 + $0x14] sm:$0xf]
    %v372 = vld [vmem:[%s365 + $0x18] sm:$0xf]
    %v373 = vld [vmem:[%s365 + $0x1c] sm:$0xf]
    %v374 = vld [vmem:[%s365 + $0x20] sm:$0xf]
    %v375 = vld [vmem:[%s365 + $0x24] sm:$0xf]
    %v376 = vld [vmem:[%s365 + $0x28] sm:$0xf]
    %v377 = vld [vmem:[%s365 + $0x2c] sm:$0xf]
    %v378 = vld [vmem:[%s365 + $0x30] sm:$0xf]
    %v379 = vld [vmem:[%s365 + $0x34] sm:$0xf]
    %v380 = vld [vmem:[%s365 + $0x38] sm:$0xf]
    %v381 = vld [vmem:[%s365 + $0x3c] sm:$0xf]
    %v382 = vld [vmem:[%s365 + $0x40] sm:$0xf]
    %v383 = vld [vmem:[%s365 + $0x44] sm:$0xf]
    %v384 = vld [vmem:[%s365 + $0x48] sm:$0xf]
    %v385 = vld [vmem:[%s365 + $0x4c] sm:$0xf]
    %v386 = vld [vmem:[%s365 + $0x50] sm:$0xf]
    %v387 = vld [vmem:[%s365 + $0x54] sm:$0xf]
    %v388 = vld [vmem:[%s365 + $0x58] sm:$0xf]
    %v389 = vld [vmem:[%s365 + $0x5c] sm:$0xf]
    %v390 = vld [vmem:[%s365 + $0x60] sm:$0xf]
    %v391 = vld [vmem:[%s365 + $0x64] sm:$0xf]
    %v392 = vld [vmem:[%s365 + $0x68] sm:$0xf]
    %v393 = vld [vmem:[%s365 + $0x6c] sm:$0xf]
    %v394 = vld [vmem:[%s365 + $0x70] sm:$0xf]
    %v395 = vld [vmem:[%s365 + $0x74] sm:$0xf]
    %v396 = vld [vmem:[%s365 + $0x78] sm:$0xf]
    %v397 = vld [vmem:[%s365 + $0x7c] sm:$0xf]
    %s398 = scalar_lea.vmem [#allocation7], 1
    %v399 = vld [vmem:[%s398] sm:$0x1]
    %v400 = vrot.slane %v361, 7
    %v401 = vrot.slane %v362, 7
    %v402 = vrot.slane %v363, 7
    %v403 = vrot.slane %v364, 7
    %v404 = vsel %vm211, %v402, %v403
    %v405 = vsel %vm211, %v401, %v402
    %v406 = vsel %vm211, %v400, %v401
    %v407 = vsel %vm211, %v403, %v400
    %v408 = vsel %vm170, %v407, 0.0
    %v409 = vsel %vm171, %v406, 0.0
    %v410 = vsel %vm172, %v405, 0.0
    %v411 = vsel %vm173, %v404, 0.0
    %v412 = vpack.c.bf16 %v409, %v408
    %v413 = vpack.c.bf16 %v362, %v361
    %v414 = vpack.c.bf16 %v411, %v410
    %v415 = vpack.c.bf16 %v364, %v363
    %v417 = vperm.slane %v399, 0
    %v451 = vunpack.c.l.b16 %v366
    %v452 = vunpack.c.l.b16 %v367
    %v453 = vunpack.c.l.b16 %v368
    %v454 = vunpack.c.l.b16 %v369
    %v455 = vunpack.c.l.b16 %v370
    %v456 = vunpack.c.l.b16 %v371
    %v457 = vunpack.c.l.b16 %v372
    %v458 = vunpack.c.l.b16 %v373
    %v459 = vunpack.c.l.b16 %v374
    %v460 = vunpack.c.l.b16 %v375
    %v461 = vunpack.c.l.b16 %v376
    %v462 = vunpack.c.l.b16 %v377
    %v463 = vunpack.c.l.b16 %v378
    %v464 = vunpack.c.l.b16 %v379
    %v465 = vunpack.c.l.b16 %v380
    %v466 = vunpack.c.l.b16 %v381
    %v467 = vunpack.c.l.b16 %v382
    %v468 = vunpack.c.l.b16 %v383
    %v469 = vunpack.c.l.b16 %v384
    %v470 = vunpack.c.l.b16 %v385
    %v471 = vunpack.c.l.b16 %v386
    %v472 = vunpack.c.l.b16 %v387
    %v473 = vunpack.c.l.b16 %v388
    %v474 = vunpack.c.l.b16 %v389
    %v475 = vunpack.c.l.b16 %v390
    %v476 = vunpack.c.l.b16 %v391
    %v477 = vunpack.c.l.b16 %v392
    %v478 = vunpack.c.l.b16 %v393
    %v479 = vunpack.c.l.b16 %v394
    %v480 = vunpack.c.l.b16 %v395
    %v481 = vunpack.c.l.b16 %v396
    %v482 = vunpack.c.l.b16 %v397
    %v483 = vpack.c.b16 %v452, %v451
    %v484 = vpack.c.b16 %v454, %v453
    %v485 = vpack.c.b16 %v456, %v455
    %v486 = vpack.c.b16 %v458, %v457
    %v487 = vpack.c.b16 %v460, %v459
    %v488 = vpack.c.b16 %v462, %v461
    %v489 = vpack.c.b16 %v464, %v463
    %v490 = vpack.c.b16 %v466, %v465
    %v491 = vpack.c.b16 %v468, %v467
    %v492 = vpack.c.b16 %v470, %v469
    %v493 = vpack.c.b16 %v472, %v471
    %v494 = vpack.c.b16 %v474, %v473
    %v495 = vpack.c.b16 %v476, %v475
    %v496 = vpack.c.b16 %v478, %v477
    %v497 = vpack.c.b16 %v480, %v479
    %v498 = vpack.c.b16 %v482, %v481
    %515 = vmatpush.bf16.msra.mxu0 %v490
    %516 = vmatpush.bf16.msra.mxu0 %v489
    %517 = vmatpush.bf16.msra.mxu0 %v488
    %518 = vmatpush.bf16.msra.mxu0 %v487
    %519 = vmatpush.bf16.msra.mxu0 %v486
    %520 = vmatpush.bf16.msra.mxu0 %v485
    %521 = vmatpush.bf16.msra.mxu0 %v484
    %522 = vmatpush.bf16.msra.mxu0 %v483
    %523 = vmatmul.bf16.gmra.mxu0 %v412
    %v524 = vpop.f32.mrf.mxu0
    %v525 = vadd.f32 %v417, %v524
    %v526 = vpop.f32.mrf.mxu0
    %v527 = vadd.f32 %v417, %v526
    %528 = vmatmul.bf16.gmra.mxu0 %v414
    %v529 = vpop.f32.mrf.mxu0
    %v530 = vadd.f32 %v417, %v529
    %v531 = vpop.f32.mrf.mxu0
    %v532 = vadd.f32 %v417, %v531
    %533 = vdwg.mxu0
    %534 = vmatpush.bf16.msra.mxu0 %v498
    %535 = vmatpush.bf16.msra.mxu0 %v497
    %536 = vmatpush.bf16.msra.mxu0 %v496
    %537 = vmatpush.bf16.msra.mxu0 %v495
    %538 = vmatpush.bf16.msra.mxu0 %v494
    %539 = vmatpush.bf16.msra.mxu0 %v493
    %540 = vmatpush.bf16.msra.mxu0 %v492
    %541 = vmatpush.bf16.msra.mxu0 %v491
    %542 = vmatmul.bf16.gmra.mxu0 %v413
    %v543 = vpop.f32.mrf.mxu0
    %v544 = vadd.f32 %v525, %v543
    %v545 = vpop.f32.mrf.mxu0
    %v546 = vadd.f32 %v527, %v545
    %547 = vmatmul.bf16.gmra.mxu0 %v415
    %v548 = vpop.f32.mrf.mxu0
    %v549 = vadd.f32 %v530, %v548
    %v550 = vpop.f32.mrf.mxu0
    %v551 = vadd.f32 %v532, %v550
    %552 = vdwg.mxu0
    %v553 = vmax.f32 %v544, 0.0
    %v554 = vmax.f32 %v546, 0.0
    %v555 = vmax.f32 %v549, 0.0
    %v556 = vmax.f32 %v551, 0.0
    %v557 = vld [vmem:[#allocation8] sm:$0xf]
    %v558 = vld [vmem:[#allocation8 + $0x4] sm:$0xf]
    %v559 = vld [vmem:[#allocation8 + $0x8] sm:$0xf]
    %v560 = vld [vmem:[#allocation8 + $0xc] sm:$0xf]
    %v561 = vld [vmem:[#allocation8 + $0x10] sm:$0xf]
    %v562 = vld [vmem:[#allocation8 + $0x14] sm:$0xf]
    %v563 = vld [vmem:[#allocation8 + $0x18] sm:$0xf]
    %v564 = vld [vmem:[#allocation8 + $0x1c] sm:$0xf]
    %v565 = vld [vmem:[#allocation8 + $0x20] sm:$0xf]
    %v566 = vld [vmem:[#allocation8 + $0x24] sm:$0xf]
    %v567 = vld [vmem:[#allocation8 + $0x28] sm:$0xf]
    %v568 = vld [vmem:[#allocation8 + $0x2c] sm:$0xf]
    %v569 = vld [vmem:[#allocation8 + $0x30] sm:$0xf]
    %v570 = vld [vmem:[#allocation8 + $0x34] sm:$0xf]
    %v571 = vld [vmem:[#allocation8 + $0x38] sm:$0xf]
    %v572 = vld [vmem:[#allocation8 + $0x3c] sm:$0xf]
    %v573 = vld [vmem:[%s4] sm:$0x1]
    %v575 = vperm.slane %v573, 0
    %v593 = vunpack.c.l.b16 %v557
    %v594 = vunpack.c.l.b16 %v558
    %v595 = vunpack.c.l.b16 %v559
    %v596 = vunpack.c.l.b16 %v560
    %v597 = vunpack.c.l.b16 %v561
    %v598 = vunpack.c.l.b16 %v562
    %v599 = vunpack.c.l.b16 %v563
    %v600 = vunpack.c.l.b16 %v564
    %v601 = vunpack.c.l.b16 %v565
    %v602 = vunpack.c.l.b16 %v566
    %v603 = vunpack.c.l.b16 %v567
    %v604 = vunpack.c.l.b16 %v568
    %v605 = vunpack.c.l.b16 %v569
    %v606 = vunpack.c.l.b16 %v570
    %v607 = vunpack.c.l.b16 %v571
    %v608 = vunpack.c.l.b16 %v572
    %v609 = vpack.c.b16 %v594, %v593
    %v610 = vpack.c.b16 %v596, %v595
    %v611 = vpack.c.b16 %v598, %v597
    %v612 = vpack.c.b16 %v600, %v599
    %v613 = vpack.c.b16 %v602, %v601
    %v614 = vpack.c.b16 %v604, %v603
    %v615 = vpack.c.b16 %v606, %v605
    %v616 = vpack.c.b16 %v608, %v607
    %625 = vmatpush.bf16.msra.mxu0 %v616
    %626 = vmatpush.bf16.msra.mxu0 %v615
    %627 = vmatpush.bf16.msra.mxu0 %v614
    %628 = vmatpush.bf16.msra.mxu0 %v613
    %629 = vmatpush.bf16.msra.mxu0 %v612
    %630 = vmatpush.bf16.msra.mxu0 %v611
    %631 = vmatpush.bf16.msra.mxu0 %v610
    %632 = vmatpush.bf16.msra.mxu0 %v609
    %633 = vmatmul.bf16.gmra.mxu0 %v221
    %v634 = vpop.f32.mrf.mxu0
    %v635 = vadd.f32 %v575, %v634
    %v636 = vpop.f32.mrf.mxu0
    %v637 = vadd.f32 %v575, %v636
    %638 = vmatmul.bf16.gmra.mxu0 %v223
    %v639 = vpop.f32.mrf.mxu0
    %v640 = vadd.f32 %v575, %v639
    %v641 = vpop.f32.mrf.mxu0
    %v642 = vadd.f32 %v575, %v641
    %643 = vdwg.mxu0
    %v644 = vadd.f32 %v553, %v635
    %v645 = vadd.f32 %v554, %v637
    %v646 = vadd.f32 %v555, %v640
    %v647 = vadd.f32 %v556, %v642
    %v648 = vmax.f32 %v644, 0.0
    %v649 = vmax.f32 %v645, 0.0
    %v650 = vmax.f32 %v646, 0.0
    %v651 = vmax.f32 %v647, 0.0
    %vm652 = vcmp.ge.s32.totalorder %v158, 2
    %vm653 = vcmp.ge.s32.totalorder %v159, 2
    %vm654 = vcmp.ge.s32.totalorder %v160, 2
    %vm655 = vcmp.ge.s32.totalorder %v161, 2
    %v656 = vsel %vm652, 1, 0
    %v657 = vsel %vm653, 1, 0
    %v658 = vsel %vm654, 1, 0
    %v659 = vsel %vm655, 1, 0
    %vm660 = vcmp.eq.s32.totalorder %v656, 1
    %vm661 = vcmp.eq.s32.totalorder %v657, 1
    %vm662 = vcmp.eq.s32.totalorder %v658, 1
    %vm663 = vcmp.eq.s32.totalorder %v659, 1
    %s664 = scalar_lea.vmem [#allocation5], 256
    %v665 = vld [vmem:[%s664] sm:$0xf]
    %v666 = vld [vmem:[%s664 + $0x4] sm:$0xf]
    %v667 = vld [vmem:[%s664 + $0x8] sm:$0xf]
    %v668 = vld [vmem:[%s664 + $0xc] sm:$0xf]
    %v669 = vld [vmem:[%s664 + $0x10] sm:$0xf]
    %v670 = vld [vmem:[%s664 + $0x14] sm:$0xf]
    %v671 = vld [vmem:[%s664 + $0x18] sm:$0xf]
    %v672 = vld [vmem:[%s664 + $0x1c] sm:$0xf]
    %v673 = vld [vmem:[%s664 + $0x20] sm:$0xf]
    %v674 = vld [vmem:[%s664 + $0x24] sm:$0xf]
    %v675 = vld [vmem:[%s664 + $0x28] sm:$0xf]
    %v676 = vld [vmem:[%s664 + $0x2c] sm:$0xf]
    %v677 = vld [vmem:[%s664 + $0x30] sm:$0xf]
    %v678 = vld [vmem:[%s664 + $0x34] sm:$0xf]
    %v679 = vld [vmem:[%s664 + $0x38] sm:$0xf]
    %v680 = vld [vmem:[%s664 + $0x3c] sm:$0xf]
    %v681 = vld [vmem:[%s664 + $0x40] sm:$0xf]
    %v682 = vld [vmem:[%s664 + $0x44] sm:$0xf]
    %v683 = vld [vmem:[%s664 + $0x48] sm:$0xf]
    %v684 = vld [vmem:[%s664 + $0x4c] sm:$0xf]
    %v685 = vld [vmem:[%s664 + $0x50] sm:$0xf]
    %v686 = vld [vmem:[%s664 + $0x54] sm:$0xf]
    %v687 = vld [vmem:[%s664 + $0x58] sm:$0xf]
    %v688 = vld [vmem:[%s664 + $0x5c] sm:$0xf]
    %v689 = vld [vmem:[%s664 + $0x60] sm:$0xf]
    %v690 = vld [vmem:[%s664 + $0x64] sm:$0xf]
    %v691 = vld [vmem:[%s664 + $0x68] sm:$0xf]
    %v692 = vld [vmem:[%s664 + $0x6c] sm:$0xf]
    %v693 = vld [vmem:[%s664 + $0x70] sm:$0xf]
    %v694 = vld [vmem:[%s664 + $0x74] sm:$0xf]
    %v695 = vld [vmem:[%s664 + $0x78] sm:$0xf]
    %v696 = vld [vmem:[%s664 + $0x7c] sm:$0xf]
    %s697 = scalar_lea.vmem [#allocation7], 2
    %v698 = vld [vmem:[%s697] sm:$0x1]
    %v699 = vrot.slane %v648, 6
    %v700 = vrot.slane %v649, 6
    %v701 = vrot.slane %v650, 6
    %v702 = vrot.slane %v651, 6
    %vm703 = vcmp.lt.s32.totalorder %v110, 2
    %v704 = vsel %vm703, %v701, %v702
    %v705 = vsel %vm703, %v700, %v701
    %v706 = vsel %vm703, %v699, %v700
    %v707 = vsel %vm703, %v702, %v699
    %v708 = vsel %vm660, %v707, 0.0
    %v709 = vsel %vm661, %v706, 0.0
    %v710 = vsel %vm662, %v705, 0.0
    %v711 = vsel %vm663, %v704, 0.0
    %v712 = vpack.c.bf16 %v709, %v708
    %v713 = vpack.c.bf16 %v649, %v648
    %v714 = vpack.c.bf16 %v711, %v710
    %v715 = vpack.c.bf16 %v651, %v650
    %v717 = vperm.slane %v698, 0
    %v751 = vunpack.c.l.b16 %v665
    %v752 = vunpack.c.l.b16 %v666
    %v753 = vunpack.c.l.b16 %v667
    %v754 = vunpack.c.l.b16 %v668
    %v755 = vunpack.c.l.b16 %v669
    %v756 = vunpack.c.l.b16 %v670
    %v757 = vunpack.c.l.b16 %v671
    %v758 = vunpack.c.l.b16 %v672
    %v759 = vunpack.c.l.b16 %v673
    %v760 = vunpack.c.l.b16 %v674
    %v761 = vunpack.c.l.b16 %v675
    %v762 = vunpack.c.l.b16 %v676
    %v763 = vunpack.c.l.b16 %v677
    %v764 = vunpack.c.l.b16 %v678
    %v765 = vunpack.c.l.b16 %v679
    %v766 = vunpack.c.l.b16 %v680
    %v767 = vunpack.c.l.b16 %v681
    %v768 = vunpack.c.l.b16 %v682
    %v769 = vunpack.c.l.b16 %v683
    %v770 = vunpack.c.l.b16 %v684
    %v771 = vunpack.c.l.b16 %v685
    %v772 = vunpack.c.l.b16 %v686
    %v773 = vunpack.c.l.b16 %v687
    %v774 = vunpack.c.l.b16 %v688
    %v775 = vunpack.c.l.b16 %v689
    %v776 = vunpack.c.l.b16 %v690
    %v777 = vunpack.c.l.b16 %v691
    %v778 = vunpack.c.l.b16 %v692
    %v779 = vunpack.c.l.b16 %v693
    %v780 = vunpack.c.l.b16 %v694
    %v781 = vunpack.c.l.b16 %v695
    %v782 = vunpack.c.l.b16 %v696
    %v783 = vpack.c.b16 %v752, %v751
    %v784 = vpack.c.b16 %v754, %v753
    %v785 = vpack.c.b16 %v756, %v755
    %v786 = vpack.c.b16 %v758, %v757
    %v787 = vpack.c.b16 %v760, %v759
    %v788 = vpack.c.b16 %v762, %v761
    %v789 = vpack.c.b16 %v764, %v763
    %v790 = vpack.c.b16 %v766, %v765
    %v791 = vpack.c.b16 %v768, %v767
    %v792 = vpack.c.b16 %v770, %v769
    %v793 = vpack.c.b16 %v772, %v771
    %v794 = vpack.c.b16 %v774, %v773
    %v795 = vpack.c.b16 %v776, %v775
    %v796 = vpack.c.b16 %v778, %v777
    %v797 = vpack.c.b16 %v780, %v779
    %v798 = vpack.c.b16 %v782, %v781
    %815 = vmatpush.bf16.msra.mxu0 %v790
    %816 = vmatpush.bf16.msra.mxu0 %v789
    %817 = vmatpush.bf16.msra.mxu0 %v788
    %818 = vmatpush.bf16.msra.mxu0 %v787
    %819 = vmatpush.bf16.msra.mxu0 %v786
    %820 = vmatpush.bf16.msra.mxu0 %v785
    %821 = vmatpush.bf16.msra.mxu0 %v784
    %822 = vmatpush.bf16.msra.mxu0 %v783
    %823 = vmatmul.bf16.gmra.mxu0 %v712
    %v824 = vpop.f32.mrf.mxu0
    %v825 = vadd.f32 %v717, %v824
    %v826 = vpop.f32.mrf.mxu0
    %v827 = vadd.f32 %v717, %v826
    %828 = vmatmul.bf16.gmra.mxu0 %v714
    %v829 = vpop.f32.mrf.mxu0
    %v830 = vadd.f32 %v717, %v829
    %v831 = vpop.f32.mrf.mxu0
    %v832 = vadd.f32 %v717, %v831
    %833 = vdwg.mxu0
    %834 = vmatpush.bf16.msra.mxu0 %v798
    %835 = vmatpush.bf16.msra.mxu0 %v797
    %836 = vmatpush.bf16.msra.mxu0 %v796
    %837 = vmatpush.bf16.msra.mxu0 %v795
    %838 = vmatpush.bf16.msra.mxu0 %v794
    %839 = vmatpush.bf16.msra.mxu0 %v793
    %840 = vmatpush.bf16.msra.mxu0 %v792
    %841 = vmatpush.bf16.msra.mxu0 %v791
    %842 = vmatmul.bf16.gmra.mxu0 %v713
    %v843 = vpop.f32.mrf.mxu0
    %v844 = vadd.f32 %v825, %v843
    %v845 = vpop.f32.mrf.mxu0
    %v846 = vadd.f32 %v827, %v845
    %847 = vmatmul.bf16.gmra.mxu0 %v715
    %v848 = vpop.f32.mrf.mxu0
    %v849 = vadd.f32 %v830, %v848
    %v850 = vpop.f32.mrf.mxu0
    %v851 = vadd.f32 %v832, %v850
    %852 = vdwg.mxu0
    %v853 = vmax.f32 %v844, 0.0
    %v854 = vmax.f32 %v846, 0.0
    %v855 = vmax.f32 %v849, 0.0
    %v856 = vmax.f32 %v851, 0.0
    %s857 = scalar_lea.vmem [#allocation5], 384
    %v858 = vld [vmem:[%s857] sm:$0xf]
    %v859 = vld [vmem:[%s857 + $0x4] sm:$0xf]
    %v860 = vld [vmem:[%s857 + $0x8] sm:$0xf]
    %v861 = vld [vmem:[%s857 + $0xc] sm:$0xf]
    %v862 = vld [vmem:[%s857 + $0x10] sm:$0xf]
    %v863 = vld [vmem:[%s857 + $0x14] sm:$0xf]
    %v864 = vld [vmem:[%s857 + $0x18] sm:$0xf]
    %v865 = vld [vmem:[%s857 + $0x1c] sm:$0xf]
    %v866 = vld [vmem:[%s857 + $0x20] sm:$0xf]
    %v867 = vld [vmem:[%s857 + $0x24] sm:$0xf]
    %v868 = vld [vmem:[%s857 + $0x28] sm:$0xf]
    %v869 = vld [vmem:[%s857 + $0x2c] sm:$0xf]
    %v870 = vld [vmem:[%s857 + $0x30] sm:$0xf]
    %v871 = vld [vmem:[%s857 + $0x34] sm:$0xf]
    %v872 = vld [vmem:[%s857 + $0x38] sm:$0xf]
    %v873 = vld [vmem:[%s857 + $0x3c] sm:$0xf]
    %v874 = vld [vmem:[%s857 + $0x40] sm:$0xf]
    %v875 = vld [vmem:[%s857 + $0x44] sm:$0xf]
    %v876 = vld [vmem:[%s857 + $0x48] sm:$0xf]
    %v877 = vld [vmem:[%s857 + $0x4c] sm:$0xf]
    %v878 = vld [vmem:[%s857 + $0x50] sm:$0xf]
    %v879 = vld [vmem:[%s857 + $0x54] sm:$0xf]
    %v880 = vld [vmem:[%s857 + $0x58] sm:$0xf]
    %v881 = vld [vmem:[%s857 + $0x5c] sm:$0xf]
    %v882 = vld [vmem:[%s857 + $0x60] sm:$0xf]
    %v883 = vld [vmem:[%s857 + $0x64] sm:$0xf]
    %v884 = vld [vmem:[%s857 + $0x68] sm:$0xf]
    %v885 = vld [vmem:[%s857 + $0x6c] sm:$0xf]
    %v886 = vld [vmem:[%s857 + $0x70] sm:$0xf]
    %v887 = vld [vmem:[%s857 + $0x74] sm:$0xf]
    %v888 = vld [vmem:[%s857 + $0x78] sm:$0xf]
    %v889 = vld [vmem:[%s857 + $0x7c] sm:$0xf]
    %s890 = scalar_lea.vmem [#allocation7], 3
    %v891 = vld [vmem:[%s890] sm:$0x1]
    %v892 = vrot.slane %v853, 6
    %v893 = vrot.slane %v854, 6
    %v894 = vrot.slane %v855, 6
    %v895 = vrot.slane %v856, 6
    %v896 = vsel %vm703, %v894, %v895
    %v897 = vsel %vm703, %v893, %v894
    %v898 = vsel %vm703, %v892, %v893
    %v899 = vsel %vm703, %v895, %v892
    %v900 = vsel %vm660, %v899, 0.0
    %v901 = vsel %vm661, %v898, 0.0
    %v902 = vsel %vm662, %v897, 0.0
    %v903 = vsel %vm663, %v896, 0.0
    %v904 = vpack.c.bf16 %v901, %v900
    %v905 = vpack.c.bf16 %v854, %v853
    %v906 = vpack.c.bf16 %v903, %v902
    %v907 = vpack.c.bf16 %v856, %v855
    %v909 = vperm.slane %v891, 0
    %v943 = vunpack.c.l.b16 %v858
    %v944 = vunpack.c.l.b16 %v859
    %v945 = vunpack.c.l.b16 %v860
    %v946 = vunpack.c.l.b16 %v861
    %v947 = vunpack.c.l.b16 %v862
    %v948 = vunpack.c.l.b16 %v863
    %v949 = vunpack.c.l.b16 %v864
    %v950 = vunpack.c.l.b16 %v865
    %v951 = vunpack.c.l.b16 %v866
    %v952 = vunpack.c.l.b16 %v867
    %v953 = vunpack.c.l.b16 %v868
    %v954 = vunpack.c.l.b16 %v869
    %v955 = vunpack.c.l.b16 %v870
    %v956 = vunpack.c.l.b16 %v871
    %v957 = vunpack.c.l.b16 %v872
    %v958 = vunpack.c.l.b16 %v873
    %v959 = vunpack.c.l.b16 %v874
    %v960 = vunpack.c.l.b16 %v875
    %v961 = vunpack.c.l.b16 %v876
    %v962 = vunpack.c.l.b16 %v877
    %v963 = vunpack.c.l.b16 %v878
    %v964 = vunpack.c.l.b16 %v879
    %v965 = vunpack.c.l.b16 %v880
    %v966 = vunpack.c.l.b16 %v881
    %v967 = vunpack.c.l.b16 %v882
    %v968 = vunpack.c.l.b16 %v883
    %v969 = vunpack.c.l.b16 %v884
    %v970 = vunpack.c.l.b16 %v885
    %v971 = vunpack.c.l.b16 %v886
    %v972 = vunpack.c.l.b16 %v887
    %v973 = vunpack.c.l.b16 %v888
    %v974 = vunpack.c.l.b16 %v889
    %v975 = vpack.c.b16 %v944, %v943
    %v976 = vpack.c.b16 %v946, %v945
    %v977 = vpack.c.b16 %v948, %v947
    %v978 = vpack.c.b16 %v950, %v949
    %v979 = vpack.c.b16 %v952, %v951
    %v980 = vpack.c.b16 %v954, %v953
    %v981 = vpack.c.b16 %v956, %v955
    %v982 = vpack.c.b16 %v958, %v957
    %v983 = vpack.c.b16 %v960, %v959
    %v984 = vpack.c.b16 %v962, %v961
    %v985 = vpack.c.b16 %v964, %v963
    %v986 = vpack.c.b16 %v966, %v965
    %v987 = vpack.c.b16 %v968, %v967
    %v988 = vpack.c.b16 %v970, %v969
    %v989 = vpack.c.b16 %v972, %v971
    %v990 = vpack.c.b16 %v974, %v973
    %1007 = vmatpush.bf16.msra.mxu0 %v982
    %1008 = vmatpush.bf16.msra.mxu0 %v981
    %1009 = vmatpush.bf16.msra.mxu0 %v980
    %1010 = vmatpush.bf16.msra.mxu0 %v979
    %1011 = vmatpush.bf16.msra.mxu0 %v978
    %1012 = vmatpush.bf16.msra.mxu0 %v977
    %1013 = vmatpush.bf16.msra.mxu0 %v976
    %1014 = vmatpush.bf16.msra.mxu0 %v975
    %1015 = vmatmul.bf16.gmra.mxu0 %v904
    %v1016 = vpop.f32.mrf.mxu0
    %v1017 = vpop.f32.mrf.mxu0
    %v1018 = vadd.f32 %v909, %v1017
    %1019 = vmatmul.bf16.gmra.mxu0 %v906
    %v1020 = vpop.f32.mrf.mxu0
    %v1021 = vpop.f32.mrf.mxu0
    %v1022 = vadd.f32 %v909, %v1021
    %1023 = vdwg.mxu0
    %1024 = vmatpush.bf16.msra.mxu0 %v990
    %1025 = vmatpush.bf16.msra.mxu0 %v989
    %1026 = vmatpush.bf16.msra.mxu0 %v988
    %1027 = vmatpush.bf16.msra.mxu0 %v987
    %1028 = vmatpush.bf16.msra.mxu0 %v986
    %1029 = vmatpush.bf16.msra.mxu0 %v985
    %1030 = vmatpush.bf16.msra.mxu0 %v984
    %1031 = vmatpush.bf16.msra.mxu0 %v983
    %1032 = vmatmul.bf16.gmra.mxu0 %v905
    %v1033 = vpop.f32.mrf.mxu0
    %v1034 = vpop.f32.mrf.mxu0
    %v1035 = vadd.f32 %v1018, %v1034
    %1036 = vmatmul.bf16.gmra.mxu0 %v907
    %v1037 = vpop.f32.mrf.mxu0
    %v1038 = vpop.f32.mrf.mxu0
    %v1039 = vadd.f32 %v1022, %v1038
    %1040 = vdwg.mxu0
    %v1041 = vmax.f32 %v1035, 0.0
    %v1042 = vmax.f32 %v1039, 0.0
    %v1043 = vadd.f32 %v1041, %v649
    %v1044 = vadd.f32 %v1042, %v651
    %v1045 = vmax.f32 %v1043, 0.0
    %v1046 = vmax.f32 %v1044, 0.0
    %v1047 = vpack.c.bf16 %v1045, %v1045
    %v1048 = vpack.c.bf16 %v1046, %v1046
    %v1049 = vld [vmem:[#allocation10] sm:$0xf]
    %v1050 = vld [vmem:[#allocation10 + $0x4] sm:$0xf]
    %v1051 = vld [vmem:[#allocation10 + $0x8] sm:$0xf]
    %v1052 = vld [vmem:[#allocation10 + $0xc] sm:$0xf]
    %v1053 = vld [vmem:[#allocation10 + $0x10] sm:$0xf]
    %v1054 = vld [vmem:[#allocation10 + $0x14] sm:$0xf]
    %v1055 = vld [vmem:[#allocation10 + $0x18] sm:$0xf]
    %v1056 = vld [vmem:[#allocation10 + $0x1c] sm:$0xf]
    %v1057 = vld [vmem:[#allocation10 + $0x20] sm:$0xf]
    %v1058 = vld [vmem:[#allocation10 + $0x24] sm:$0xf]
    %v1059 = vld [vmem:[#allocation10 + $0x28] sm:$0xf]
    %v1060 = vld [vmem:[#allocation10 + $0x2c] sm:$0xf]
    %v1061 = vld [vmem:[#allocation10 + $0x30] sm:$0xf]
    %v1062 = vld [vmem:[#allocation10 + $0x34] sm:$0xf]
    %v1063 = vld [vmem:[#allocation10 + $0x38] sm:$0xf]
    %v1064 = vld [vmem:[#allocation10 + $0x3c] sm:$0xf]
    %v1065 = vld [vmem:[%s6] sm:$0x1]
    %v1067 = vperm.slane %v1065, 0
    %v1071 = vunpack.c.l.b16 %v1047
    %v1072 = vunpack.c.l.b16 %v1048
    %v1073 = vrot.slane %v1071, 7
    %v1074 = vrot.slane %v1072, 6
    %vm1075 = vcmask 1041409
    %v1076 = vsel %vm1075, %v1074, %v1073
    %v1077 = vpack.c.b16 %v1076, %v1076
    %v1095 = vunpack.c.l.b16 %v1049
    %v1096 = vunpack.c.l.b16 %v1050
    %v1097 = vunpack.c.l.b16 %v1051
    %v1098 = vunpack.c.l.b16 %v1052
    %v1099 = vunpack.c.l.b16 %v1053
    %v1100 = vunpack.c.l.b16 %v1054
    %v1101 = vunpack.c.l.b16 %v1055
    %v1102 = vunpack.c.l.b16 %v1056
    %v1103 = vunpack.c.l.b16 %v1057
    %v1104 = vunpack.c.l.b16 %v1058
    %v1105 = vunpack.c.l.b16 %v1059
    %v1106 = vunpack.c.l.b16 %v1060
    %v1107 = vunpack.c.l.b16 %v1061
    %v1108 = vunpack.c.l.b16 %v1062
    %v1109 = vunpack.c.l.b16 %v1063
    %v1110 = vunpack.c.l.b16 %v1064
    %v1111 = vpack.c.b16 %v1096, %v1095
    %v1112 = vpack.c.b16 %v1098, %v1097
    %v1113 = vpack.c.b16 %v1100, %v1099
    %v1114 = vpack.c.b16 %v1102, %v1101
    %v1115 = vpack.c.b16 %v1104, %v1103
    %v1116 = vpack.c.b16 %v1106, %v1105
    %v1117 = vpack.c.b16 %v1108, %v1107
    %v1118 = vpack.c.b16 %v1110, %v1109
    %1127 = vmatpush.bf16.msra.mxu0 %v1118
    %1128 = vmatpush.bf16.msra.mxu0 %v1117
    %1129 = vmatpush.bf16.msra.mxu0 %v1116
    %1130 = vmatpush.bf16.msra.mxu0 %v1115
    %1131 = vmatpush.bf16.msra.mxu0 %v1114
    %1132 = vmatpush.bf16.msra.mxu0 %v1113
    %1133 = vmatpush.bf16.msra.mxu0 %v1112
    %1134 = vmatpush.bf16.msra.mxu0 %v1111
    %1135 = vmatmul.bf16.gmra.mxu0 %v1077
    %v1136 = vpop.f32.mrf.mxu0
    %v1137 = vadd.f32 %v1067, %v1136
    %v1138 = vpop.f32.mrf.mxu0
    %1139 = vdwg.mxu0
    %v1141 = vrot.slane %v1137, 1
    %1143 = vst [vmem:[#allocation11] sm:$0x1] %v1137
    %1144 = vst [vmem:[#allocation11 + $0x1] sm:$0x1] %v1141
    // Predicated region
    $region50: #{tpu_custom_call.1} parent=1 // pred_check
      _
    $region51: #{tpu_custom_call.1} parent=1 // pred_check_branch
      %1146 = sbr.rel (0) target = $region53
    $region52: #{tpu_custom_call.1} parent=1 // pred_region
      %1148 = vsyncadd [#allocation4], 0
      %s1149 = sshll.u32 [#allocation11], 4
      %s1150 = int_to_ptr.vmem [resolvable:$true] %s1149
      %s1151 = sshll.u32 %s7, 4
      %s1152 = int_to_ptr.hbm [resolvable:$true] %s1151
      %1157 = dma.vmem_to_hbm [thread:$0]  %s1150, 32, %s1152, [#allocation4], 16, 16, 1
    $region53: #{tpu_custom_call.1} parent=1 // pred_fallthru
      _
    // Predicated region
    $region54: #{tpu_custom_call.1} parent=1 // pred_check
      _
    $region55: #{tpu_custom_call.1} parent=1 // pred_check_branch
      %1159 = sbr.rel (0) target = $region57
    $region56: #{tpu_custom_call.1} parent=1 // pred_region
      %1161 = dma.done [#allocation4], 32
    $region57: #{tpu_custom_call.1} parent=1 // pred_fallthru
      _
    %1162 = vsyncpa [#allocation3], 1
    %1163 = vsyncpa [#allocation6], 1
    %1164 = vsyncpa [#allocation9], 1
    %1165 = vsyncpa [#allocation4], 1

// kernel: tpu_custom_call.1
$region0: #{tpu_custom_call.1}
  #allocation0 [shape = 'u32[]', space=smem, size = 0x4, offset = 0x4, fixed_abs, tag = 'smem constant byte address 0x4 - core index']
  #allocation1 [shape = 'u32[72,128]{1,0:T(1,128)}', space=vmem, size = 0x9000, scoped, tag = 'internal scratch']
  %s0 = inlined_call_operand.hbm [shape: f32[2,16,128], index: 0, kind: input, shape index: {}]
  %s1 = inlined_call_operand.hbm [shape: bf16[2,2,256,128], index: 1, kind: input, shape index: {}]
  %s2 = inlined_call_operand.hbm [shape: f32[2,2,1,128], index: 2, kind: input, shape index: {}]
  %s3 = inlined_call_operand.hbm [shape: bf16[1,128,128], index: 3, kind: input, shape index: {}]
  %s4 = inlined_call_operand.vmem [shape: f32[1,1,128], index: 4, kind: input, shape index: {}]
  %s5 = inlined_call_operand.hbm [shape: bf16[128,128], index: 5, kind: input, shape index: {}]
  %s6 = inlined_call_operand.vmem [shape: f32[1,128], index: 6, kind: input, shape index: {}]
  %s7 = inlined_call_operand.hbm [shape: f32[2,1,128], index: 7, kind: output, shape index: {}]
  %s8 = sld [smem:[#allocation0]]
  $region58: #{tpu_custom_call.1} parent=0
    _
  %s10 = ssub.s32 1, %s8
  %s11 = scalar_select 0, %s10, %s8
  $region1: #{tpu_custom_call.1} parent=0
    #allocation2 [shape = 'u8[16384]{0}', space=vmem, size = 0x4000, scoped, tag = 'input window, operand 0, single buffered']
    #allocation3 [shape = 's32[1]{0}', space=sflag, size = 0x4, scoped, tag = 'scoped memory for tpu_custom_call.1']
    #allocation4 [shape = 's32[1]{0}', space=sflag, size = 0x4, scoped, tag = 'scoped memory for tpu_custom_call.1']
    #allocation5 [shape = 'u8[262144]{0}', space=vmem, size = 0x40000, scoped, tag = 'input window, operand 1, single buffered']
    #allocation6 [shape = 's32[1]{0}', space=sflag, size = 0x4, scoped, tag = 'scoped memory for tpu_custom_call.1']
    #allocation7 [shape = 'u8[2048]{0}', space=vmem, size = 0x800, scoped, tag = 'input window, operand 2, single buffered']
    #allocation8 [shape = 'u8[32768]{0}', space=vmem, size = 0x8000, scoped, tag = 'input window, operand 3, single buffered']
    #allocation9 [shape = 's32[1]{0}', space=sflag, size = 0x4, scoped, tag = 'scoped memory for tpu_custom_call.1']
    #allocation10 [shape = 'u8[32768]{0}', space=vmem, size = 0x8000, scoped, tag = 'input window, operand 5, single buffered']
    #allocation11 [shape = 'u8[1024]{0}', space=vmem, size = 0x400, scoped, tag = 'output window, operand 0, single buffered']
    %12 = vsyncpa [#allocation3], 0
    %13 = vsyncpa [#allocation6], 0
    %14 = vsyncpa [#allocation9], 0
    %15 = vsyncpa [#allocation4], 0
    // Predicated region
    $region2: #{tpu_custom_call.1} parent=1 // pred_check
      _
    $region3: #{tpu_custom_call.1} parent=1 // pred_check_branch
      %17 = sbr.rel (0) target = $region5
    $region4: #{tpu_custom_call.1} parent=1 // pred_region
      %19 = vsyncadd [#allocation3], 0
      %s20 = sshll.u32 %s0, 4
      %s21 = int_to_ptr.hbm [resolvable:$true] %s20
      %s22 = sshll.u32 [#allocation2], 4
      %s23 = int_to_ptr.vmem [resolvable:$true] %s22
      %28 = dma.hbm_to_vmem [thread:$0]  %s21, 512, %s23, [#allocation3], 128, 128, 8
    $region5: #{tpu_custom_call.1} parent=1 // pred_fallthru
      _
    // Predicated region
    $region6: #{tpu_custom_call.1} parent=1 // pred_check
      _
    $region7: #{tpu_custom_call.1} parent=1 // pred_check_branch
      %30 = sbr.rel (0) target = $region9
    $region8: #{tpu_custom_call.1} parent=1 // pred_region
      %32 = vsyncadd [#allocation6], 0
      %s33 = sshll.u32 %s1, 4
      %s34 = int_to_ptr.hbm [resolvable:$true] %s33
      %s35 = sshll.u32 [#allocation5], 4
      %s36 = int_to_ptr.vmem [resolvable:$true] %s35
      %41 = dma.hbm_to_vmem [thread:$0]  %s34, 8192, %s36, [#allocation6], 64, 64, 4
    $region9: #{tpu_custom_call.1} parent=1 // pred_fallthru
      _
    // Predicated region
    $region10: #{tpu_custom_call.1} parent=1 // pred_check
      _
    $region11: #{tpu_custom_call.1} parent=1 // pred_check_branch
      %43 = sbr.rel (0) target = $region13
    $region12: #{tpu_custom_call.1} parent=1 // pred_region
      %45 = vsyncadd [#allocation6], 0
      %s46 = sshll.u32 %s2, 4
      %s47 = int_to_ptr.hbm [resolvable:$true] %s46
      %s48 = sshll.u32 [#allocation7], 4
      %s49 = int_to_ptr.vmem [resolvable:$true] %s48
      %54 = dma.hbm_to_vmem [thread:$0]  %s47, 64, %s49, [#allocation6], 16, 16, 1
    $region13: #{tpu_custom_call.1} parent=1 // pred_fallthru
      _
    // Predicated region
    $region14: #{tpu_custom_call.1} parent=1 // pred_check
      _
    $region15: #{tpu_custom_call.1} parent=1 // pred_check_branch
      %56 = sbr.rel (0) target = $region17
    $region16: #{tpu_custom_call.1} parent=1 // pred_region
      %58 = vsyncadd [#allocation9], 0
      %s59 = sshll.u32 %s3, 4
      %s60 = int_to_ptr.hbm [resolvable:$true] %s59
      %s61 = sshll.u32 [#allocation8], 4
      %s62 = int_to_ptr.vmem [resolvable:$true] %s61
      %67 = dma.hbm_to_vmem [thread:$0]  %s60, 1024, %s62, [#allocation9], 64, 64, 4
    $region17: #{tpu_custom_call.1} parent=1 // pred_fallthru
      _
    // Predicated region
    $region18: #{tpu_custom_call.1} parent=1 // pred_check
      _
    $region19: #{tpu_custom_call.1} parent=1 // pred_check_branch
      %69 = sbr.rel (0) target = $region21
    $region20: #{tpu_custom_call.1} parent=1 // pred_region
      _
    $region21: #{tpu_custom_call.1} parent=1 // pred_fallthru
      _
    // Predicated region
    $region22: #{tpu_custom_call.1} parent=1 // pred_check
      _
    $region23: #{tpu_custom_call.1} parent=1 // pred_check_branch
      %71 = sbr.rel (0) target = $region25
    $region24: #{tpu_custom_call.1} parent=1 // pred_region
      %73 = vsyncadd [#allocation9], 0
      %s74 = sshll.u32 %s5, 4
      %s75 = int_to_ptr.hbm [resolvable:$true] %s74
      %s76 = sshll.u32 [#allocation10], 4
      %s77 = int_to_ptr.vmem [resolvable:$true] %s76
      %82 = dma.hbm_to_vmem [thread:$0]  %s75, 1024, %s77, [#allocation9], 64, 64, 4
    $region25: #{tpu_custom_call.1} parent=1 // pred_fallthru
      _
    // Predicated region
    $region26: #{tpu_custom_call.1} parent=1 // pred_check
      _
    $region27: #{tpu_custom_call.1} parent=1 // pred_check_branch
      %84 = sbr.rel (0) target = $region29
    $region28: #{tpu_custom_call.1} parent=1 // pred_region
      _
    $region29: #{tpu_custom_call.1} parent=1 // pred_fallthru
      _
    // Predicated region
    $region30: #{tpu_custom_call.1} parent=1 // pred_check
      _
    $region31: #{tpu_custom_call.1} parent=1 // pred_check_branch
      %86 = sbr.rel (0) target = $region33
    $region32: #{tpu_custom_call.1} parent=1 // pred_region
      %88 = dma.done [#allocation3], 512
    $region33: #{tpu_custom_call.1} parent=1 // pred_fallthru
      _
    // Predicated region
    $region34: #{tpu_custom_call.1} parent=1 // pred_check
      _
    $region35: #{tpu_custom_call.1} parent=1 // pred_check_branch
      %90 = sbr.rel (0) target = $region37
    $region36: #{tpu_custom_call.1} parent=1 // pred_region
      %92 = dma.done [#allocation6], 8192
    $region37: #{tpu_custom_call.1} parent=1 // pred_fallthru
      _
    // Predicated region
    $region38: #{tpu_custom_call.1} parent=1 // pred_check
      _
    $region39: #{tpu_custom_call.1} parent=1 // pred_check_branch
      %94 = sbr.rel (0) target = $region41
    $region40: #{tpu_custom_call.1} parent=1 // pred_region
      %96 = dma.done [#allocation6], 64
    $region41: #{tpu_custom_call.1} parent=1 // pred_fallthru
      _
    // Predicated region
    $region42: #{tpu_custom_call.1} parent=1 // pred_check
      _
    $region43: #{tpu_custom_call.1} parent=1 // pred_check_branch
      %98 = sbr.rel (0) target = $region45
    $region44: #{tpu_custom_call.1} parent=1 // pred_region
      %100 = dma.done [#allocation9], 1024
    $region45: #{tpu_custom_call.1} parent=1 // pred_fallthru
      _
    // Predicated region
    $region46: #{tpu_custom_call.1} parent=1 // pred_check
      _
    $region47: #{tpu_custom_call.1} parent=1 // pred_check_branch
      %102 = sbr.rel (0) target = $region49
    $region48: #{tpu_custom_call.1} parent=1 // pred_region
      %104 = dma.done [#allocation9], 1024
    $region49: #{tpu_custom_call.1} parent=1 // pred_fallthru
      _
    %v105 = vld [vmem:[#allocation2] sm:$0xff]
    %v106 = vld [vmem:[#allocation2 + $0x8] sm:$0xff]
    %v107 = vld [vmem:[#allocation2 + $0x10] sm:$0xff]
    %v108 = vld [vmem:[#allocation2 + $0x18] sm:$0xff]
    %v109 = vlaneseq
    %v110 = vshrl.u32 %v109, 7
    %v111 = vadd.s32 %v110, 8
    %v112 = vadd.s32 %v110, 16
    %v113 = vadd.s32 %v110, 24
    %vm114 = vcmp.lt.s32.totalorder %v110, 0
    %v115 = vsub.s32 0, %v110
    %v116 = vsel %vm114, %v115, %v110
    %v117 = vshrl.u32 %v116, 4
    %v118 = vand.u32 %v116, 15
    %v119 = vsub.s32 0, %v118
    %v120 = vsel %vm114, %v119, %v118
    %vm121 = vcmp.lt.s32.totalorder %v111, 0
    %v122 = vsub.s32 0, %v111
    %v123 = vsel %vm121, %v122, %v111
    %v124 = vshrl.u32 %v123, 4
    %v125 = vand.u32 %v123, 15
    %v126 = vsub.s32 0, %v125
    %v127 = vsel %vm121, %v126, %v125
    %vm128 = vcmp.lt.s32.totalorder %v112, 0
    %v129 = vsub.s32 0, %v112
    %v130 = vsel %vm128, %v129, %v112
    %v131 = vshrl.u32 %v130, 4
    %v132 = vand.u32 %v130, 15
    %v133 = vsub.s32 0, %v132
    %v134 = vsel %vm128, %v133, %v132
    %vm135 = vcmp.lt.s32.totalorder %v113, 0
    %v136 = vsub.s32 0, %v113
    %v137 = vsel %vm135, %v136, %v113
    %v138 = vshrl.u32 %v137, 4
    %v139 = vand.u32 %v137, 15
    %v140 = vsub.s32 0, %v139
    %v141 = vsel %vm135, %v140, %v139
    %vm142 = vcmp.ne.s32.totalorder %v120, 0
    %vm143 = vcmp.ne.s32.totalorder %v127, 0
    %vm144 = vcmp.ne.s32.totalorder %v134, 0
    %vm145 = vcmp.ne.s32.totalorder %v141, 0
    %vm146 = vcmp.lt.s32.totalorder %v120, 0
    %vm147 = vcmp.lt.s32.totalorder %v127, 0
    %vm148 = vcmp.lt.s32.totalorder %v134, 0
    %vm149 = vcmp.lt.s32.totalorder %v141, 0
    %vm150 = vmand %vm146, %vm142
    %vm151 = vmand %vm147, %vm143
    %vm152 = vmand %vm148, %vm144
    %vm153 = vmand %vm149, %vm145
    %v154 = vadd.s32 %v120, 16
    %v155 = vadd.s32 %v127, 16
    %v156 = vadd.s32 %v134, 16
    %v157 = vadd.s32 %v141, 16
    %v158 = vsel %vm150, %v154, %v120
    %v159 = vsel %vm151, %v155, %v127
    %v160 = vsel %vm152, %v156, %v134
    %v161 = vsel %vm153, %v157, %v141
    %vm162 = vcmp.ge.s32.totalorder %v158, 1
    %vm163 = vcmp.ge.s32.totalorder %v159, 1
    %vm164 = vcmp.ge.s32.totalorder %v160, 1
    %vm165 = vcmp.ge.s32.totalorder %v161, 1
    %v166 = vsel %vm162, 1, 0
    %v167 = vsel %vm163, 1, 0
    %v168 = vsel %vm164, 1, 0
    %v169 = vsel %vm165, 1, 0
    %vm170 = vcmp.eq.s32.totalorder %v166, 1
    %vm171 = vcmp.eq.s32.totalorder %v167, 1
    %vm172 = vcmp.eq.s32.totalorder %v168, 1
    %vm173 = vcmp.eq.s32.totalorder %v169, 1
    %v174 = vld [vmem:[#allocation5] sm:$0xf]
    %v175 = vld [vmem:[#allocation5 + $0x4] sm:$0xf]
    %v176 = vld [vmem:[#allocation5 + $0x8] sm:$0xf]
    %v177 = vld [vmem:[#allocation5 + $0xc] sm:$0xf]
    %v178 = vld [vmem:[#allocation5 + $0x10] sm:$0xf]
    %v179 = vld [vmem:[#allocation5 + $0x14] sm:$0xf]
    %v180 = vld [vmem:[#allocation5 + $0x18] sm:$0xf]
    %v181 = vld [vmem:[#allocation5 + $0x1c] sm:$0xf]
    %v182 = vld [vmem:[#allocation5 + $0x20] sm:$0xf]
    %v183 = vld [vmem:[#allocation5 + $0x24] sm:$0xf]
    %v184 = vld [vmem:[#allocation5 + $0x28] sm:$0xf]
    %v185 = vld [vmem:[#allocation5 + $0x2c] sm:$0xf]
    %v186 = vld [vmem:[#allocation5 + $0x30] sm:$0xf]
    %v187 = vld [vmem:[#allocation5 + $0x34] sm:$0xf]
    %v188 = vld [vmem:[#allocation5 + $0x38] sm:$0xf]
    %v189 = vld [vmem:[#allocation5 + $0x3c] sm:$0xf]
    %v190 = vld [vmem:[#allocation5 + $0x40] sm:$0xf]
    %v191 = vld [vmem:[#allocation5 + $0x44] sm:$0xf]
    %v192 = vld [vmem:[#allocation5 + $0x48] sm:$0xf]
    %v193 = vld [vmem:[#allocation5 + $0x4c] sm:$0xf]
    %v194 = vld [vmem:[#allocation5 + $0x50] sm:$0xf]
    %v195 = vld [vmem:[#allocation5 + $0x54] sm:$0xf]
    %v196 = vld [vmem:[#allocation5 + $0x58] sm:$0xf]
    %v197 = vld [vmem:[#allocation5 + $0x5c] sm:$0xf]
    %v198 = vld [vmem:[#allocation5 + $0x60] sm:$0xf]
    %v199 = vld [vmem:[#allocation5 + $0x64] sm:$0xf]
    %v200 = vld [vmem:[#allocation5 + $0x68] sm:$0xf]
    %v201 = vld [vmem:[#allocation5 + $0x6c] sm:$0xf]
    %v202 = vld [vmem:[#allocation5 + $0x70] sm:$0xf]
    %v203 = vld [vmem:[#allocation5 + $0x74] sm:$0xf]
    %v204 = vld [vmem:[#allocation5 + $0x78] sm:$0xf]
    %v205 = vld [vmem:[#allocation5 + $0x7c] sm:$0xf]
    %v206 = vld [vmem:[#allocation7] sm:$0x1]
    %v207 = vrot.slane %v105, 7
    %v208 = vrot.slane %v106, 7
    %v209 = vrot.slane %v107, 7
    %v210 = vrot.slane %v108, 7
    %vm211 = vcmp.lt.s32.totalorder %v110, 1
    %v212 = vsel %vm211, %v209, %v210
    %v213 = vsel %vm211, %v208, %v209
    %v214 = vsel %vm211, %v207, %v208
    %v215 = vsel %vm211, %v210, %v207
    %v216 = vsel %vm170, %v215, 0.0
    %v217 = vsel %vm171, %v214, 0.0
    %v218 = vsel %vm172, %v213, 0.0
    %v219 = vsel %vm173, %v212, 0.0
    %v220 = vpack.c.bf16 %v217, %v216
    %v221 = vpack.c.bf16 %v106, %v105
    %v222 = vpack.c.bf16 %v219, %v218
    %v223 = vpack.c.bf16 %v108, %v107
    %v225 = vperm.slane %v206, 0
    %v259 = vunpack.c.l.b16 %v174
    %v260 = vunpack.c.l.b16 %v175
    %v261 = vunpack.c.l.b16 %v176
    %v262 = vunpack.c.l.b16 %v177
    %v263 = vunpack.c.l.b16 %v178
    %v264 = vunpack.c.l.b16 %v179
    %v265 = vunpack.c.l.b16 %v180
    %v266 = vunpack.c.l.b16 %v181
    %v267 = vunpack.c.l.b16 %v182
    %v268 = vunpack.c.l.b16 %v183
    %v269 = vunpack.c.l.b16 %v184
    %v270 = vunpack.c.l.b16 %v185
    %v271 = vunpack.c.l.b16 %v186
    %v272 = vunpack.c.l.b16 %v187
    %v273 = vunpack.c.l.b16 %v188
    %v274 = vunpack.c.l.b16 %v189
    %v275 = vunpack.c.l.b16 %v190
    %v276 = vunpack.c.l.b16 %v191
    %v277 = vunpack.c.l.b16 %v192
    %v278 = vunpack.c.l.b16 %v193
    %v279 = vunpack.c.l.b16 %v194
    %v280 = vunpack.c.l.b16 %v195
    %v281 = vunpack.c.l.b16 %v196
    %v282 = vunpack.c.l.b16 %v197
    %v283 = vunpack.c.l.b16 %v198
    %v284 = vunpack.c.l.b16 %v199
    %v285 = vunpack.c.l.b16 %v200
    %v286 = vunpack.c.l.b16 %v201
    %v287 = vunpack.c.l.b16 %v202
    %v288 = vunpack.c.l.b16 %v203
    %v289 = vunpack.c.l.b16 %v204
    %v290 = vunpack.c.l.b16 %v205
    %v291 = vpack.c.b16 %v260, %v259
    %v292 = vpack.c.b16 %v262, %v261
    %v293 = vpack.c.b16 %v264, %v263
    %v294 = vpack.c.b16 %v266, %v265
    %v295 = vpack.c.b16 %v268, %v267
    %v296 = vpack.c.b16 %v270, %v269
    %v297 = vpack.c.b16 %v272, %v271
    %v298 = vpack.c.b16 %v274, %v273
    %v299 = vpack.c.b16 %v276, %v275
    %v300 = vpack.c.b16 %v278, %v277
    %v301 = vpack.c.b16 %v280, %v279
    %v302 = vpack.c.b16 %v282, %v281
    %v303 = vpack.c.b16 %v284, %v283
    %v304 = vpack.c.b16 %v286, %v285
    %v305 = vpack.c.b16 %v288, %v287
    %v306 = vpack.c.b16 %v290, %v289
    %323 = vmatpush.bf16.msra.mxu0 %v298
    %324 = vmatpush.bf16.msra.mxu0 %v297
    %325 = vmatpush.bf16.msra.mxu0 %v296
    %326 = vmatpush.bf16.msra.mxu0 %v295
    %327 = vmatpush.bf16.msra.mxu0 %v294
    %328 = vmatpush.bf16.msra.mxu0 %v293
    %329 = vmatpush.bf16.msra.mxu0 %v292
    %330 = vmatpush.bf16.msra.mxu0 %v291
    %331 = vmatmul.bf16.gmra.mxu0 %v220
    %v332 = vpop.f32.mrf.mxu0
    %v333 = vadd.f32 %v225, %v332
    %v334 = vpop.f32.mrf.mxu0
    %v335 = vadd.f32 %v225, %v334
    %336 = vmatmul.bf16.gmra.mxu0 %v222
    %v337 = vpop.f32.mrf.mxu0
    %v338 = vadd.f32 %v225, %v337
    %v339 = vpop.f32.mrf.mxu0
    %v340 = vadd.f32 %v225, %v339
    %341 = vdwg.mxu0
    %342 = vmatpush.bf16.msra.mxu0 %v306
    %343 = vmatpush.bf16.msra.mxu0 %v305
    %344 = vmatpush.bf16.msra.mxu0 %v304
    %345 = vmatpush.bf16.msra.mxu0 %v303
    %346 = vmatpush.bf16.msra.mxu0 %v302
    %347 = vmatpush.bf16.msra.mxu0 %v301
    %348 = vmatpush.bf16.msra.mxu0 %v300
    %349 = vmatpush.bf16.msra.mxu0 %v299
    %350 = vmatmul.bf16.gmra.mxu0 %v221
    %v351 = vpop.f32.mrf.mxu0
    %v352 = vadd.f32 %v333, %v351
    %v353 = vpop.f32.mrf.mxu0
    %v354 = vadd.f32 %v335, %v353
    %355 = vmatmul.bf16.gmra.mxu0 %v223
    %v356 = vpop.f32.mrf.mxu0
    %v357 = vadd.f32 %v338, %v356
    %v358 = vpop.f32.mrf.mxu0
    %v359 = vadd.f32 %v340, %v358
    %360 = vdwg.mxu0
    %v361 = vmax.f32 %v352, 0.0
    %v362 = vmax.f32 %v354, 0.0
    %v363 = vmax.f32 %v357, 0.0
    %v364 = vmax.f32 %v359, 0.0
    %s365 = scalar_lea.vmem [#allocation5], 128
    %v366 = vld [vmem:[%s365] sm:$0xf]
    %v367 = vld [vmem:[%s365 + $0x4] sm:$0xf]
    %v368 = vld [vmem:[%s365 + $0x8] sm:$0xf]
    %v369 = vld [vmem:[%s365 + $0xc] sm:$0xf]
    %v370 = vld [vmem:[%s365 + $0x10] sm:$0xf]
    %v371 = vld [vmem:[%s365 + $0x14] sm:$0xf]
    %v372 = vld [vmem:[%s365 + $0x18] sm:$0xf]
    %v373 = vld [vmem:[%s365 + $0x1c] sm:$0xf]
    %v374 = vld [vmem:[%s365 + $0x20] sm:$0xf]
    %v375 = vld [vmem:[%s365 + $0x24] sm:$0xf]
    %v376 = vld [vmem:[%s365 + $0x28] sm:$0xf]
    %v377 = vld [vmem:[%s365 + $0x2c] sm:$0xf]
    %v378 = vld [vmem:[%s365 + $0x30] sm:$0xf]
    %v379 = vld [vmem:[%s365 + $0x34] sm:$0xf]
    %v380 = vld [vmem:[%s365 + $0x38] sm:$0xf]
    %v381 = vld [vmem:[%s365 + $0x3c] sm:$0xf]
    %v382 = vld [vmem:[%s365 + $0x40] sm:$0xf]
    %v383 = vld [vmem:[%s365 + $0x44] sm:$0xf]
    %v384 = vld [vmem:[%s365 + $0x48] sm:$0xf]
    %v385 = vld [vmem:[%s365 + $0x4c] sm:$0xf]
    %v386 = vld [vmem:[%s365 + $0x50] sm:$0xf]
    %v387 = vld [vmem:[%s365 + $0x54] sm:$0xf]
    %v388 = vld [vmem:[%s365 + $0x58] sm:$0xf]
    %v389 = vld [vmem:[%s365 + $0x5c] sm:$0xf]
    %v390 = vld [vmem:[%s365 + $0x60] sm:$0xf]
    %v391 = vld [vmem:[%s365 + $0x64] sm:$0xf]
    %v392 = vld [vmem:[%s365 + $0x68] sm:$0xf]
    %v393 = vld [vmem:[%s365 + $0x6c] sm:$0xf]
    %v394 = vld [vmem:[%s365 + $0x70] sm:$0xf]
    %v395 = vld [vmem:[%s365 + $0x74] sm:$0xf]
    %v396 = vld [vmem:[%s365 + $0x78] sm:$0xf]
    %v397 = vld [vmem:[%s365 + $0x7c] sm:$0xf]
    %s398 = scalar_lea.vmem [#allocation7], 1
    %v399 = vld [vmem:[%s398] sm:$0x1]
    %v400 = vrot.slane %v361, 7
    %v401 = vrot.slane %v362, 7
    %v402 = vrot.slane %v363, 7
    %v403 = vrot.slane %v364, 7
    %v404 = vsel %vm211, %v402, %v403
    %v405 = vsel %vm211, %v401, %v402
    %v406 = vsel %vm211, %v400, %v401
    %v407 = vsel %vm211, %v403, %v400
    %v408 = vsel %vm170, %v407, 0.0
    %v409 = vsel %vm171, %v406, 0.0
    %v410 = vsel %vm172, %v405, 0.0
    %v411 = vsel %vm173, %v404, 0.0
    %v412 = vpack.c.bf16 %v409, %v408
    %v413 = vpack.c.bf16 %v362, %v361
    %v414 = vpack.c.bf16 %v411, %v410
    %v415 = vpack.c.bf16 %v364, %v363
    %v417 = vperm.slane %v399, 0
    %v451 = vunpack.c.l.b16 %v366
    %v452 = vunpack.c.l.b16 %v367
    %v453 = vunpack.c.l.b16 %v368
    %v454 = vunpack.c.l.b16 %v369
    %v455 = vunpack.c.l.b16 %v370
    %v456 = vunpack.c.l.b16 %v371
    %v457 = vunpack.c.l.b16 %v372
    %v458 = vunpack.c.l.b16 %v373
    %v459 = vunpack.c.l.b16 %v374
    %v460 = vunpack.c.l.b16 %v375
    %v461 = vunpack.c.l.b16 %v376
    %v462 = vunpack.c.l.b16 %v377
    %v463 = vunpack.c.l.b16 %v378
    %v464 = vunpack.c.l.b16 %v379
    %v465 = vunpack.c.l.b16 %v380
    %v466 = vunpack.c.l.b16 %v381
    %v467 = vunpack.c.l.b16 %v382
    %v468 = vunpack.c.l.b16 %v383
    %v469 = vunpack.c.l.b16 %v384
    %v470 = vunpack.c.l.b16 %v385
    %v471 = vunpack.c.l.b16 %v386
    %v472 = vunpack.c.l.b16 %v387
    %v473 = vunpack.c.l.b16 %v388
    %v474 = vunpack.c.l.b16 %v389
    %v475 = vunpack.c.l.b16 %v390
    %v476 = vunpack.c.l.b16 %v391
    %v477 = vunpack.c.l.b16 %v392
    %v478 = vunpack.c.l.b16 %v393
    %v479 = vunpack.c.l.b16 %v394
    %v480 = vunpack.c.l.b16 %v395
    %v481 = vunpack.c.l.b16 %v396
    %v482 = vunpack.c.l.b16 %v397
    %v483 = vpack.c.b16 %v452, %v451
    %v484 = vpack.c.b16 %v454, %v453
    %v485 = vpack.c.b16 %v456, %v455
    %v486 = vpack.c.b16 %v458, %v457
    %v487 = vpack.c.b16 %v460, %v459
    %v488 = vpack.c.b16 %v462, %v461
    %v489 = vpack.c.b16 %v464, %v463
    %v490 = vpack.c.b16 %v466, %v465
    %v491 = vpack.c.b16 %v468, %v467
    %v492 = vpack.c.b16 %v470, %v469
    %v493 = vpack.c.b16 %v472, %v471
    %v494 = vpack.c.b16 %v474, %v473
    %v495 = vpack.c.b16 %v476, %v475
    %v496 = vpack.c.b16 %v478, %v477
    %v497 = vpack.c.b16 %v480, %v479
    %v498 = vpack.c.b16 %v482, %v481
    %515 = vmatpush.bf16.msra.mxu0 %v490
    %516 = vmatpush.bf16.msra.mxu0 %v489
    %517 = vmatpush.bf16.msra.mxu0 %v488
    %518 = vmatpush.bf16.msra.mxu0 %v487
    %519 = vmatpush.bf16.msra.mxu0 %v486
    %520 = vmatpush.bf16.msra.mxu0 %v485
    %521 = vmatpush.bf16.msra.mxu0 %v484
    %522 = vmatpush.bf16.msra.mxu0 %v483
    %523 = vmatmul.bf16.gmra.mxu0 %v412
    %v524 = vpop.f32.mrf.mxu0
    %v525 = vadd.f32 %v417, %v524
    %v526 = vpop.f32.mrf.mxu0
    %v527 = vadd.f32 %v417, %v526
    %528 = vmatmul.bf16.gmra.mxu0 %v414
    %v529 = vpop.f32.mrf.mxu0
    %v530 = vadd.f32 %v417, %v529
    %v531 = vpop.f32.mrf.mxu0
    %v532 = vadd.f32 %v417, %v531
    %533 = vdwg.mxu0
    %534 = vmatpush.bf16.msra.mxu0 %v498
    %535 = vmatpush.bf16.msra.mxu0 %v497
    %536 = vmatpush.bf16.msra.mxu0 %v496
    %537 = vmatpush.bf16.msra.mxu0 %v495
    %538 = vmatpush.bf16.msra.mxu0 %v494
    %539 = vmatpush.bf16.msra.mxu0 %v493
    %540 = vmatpush.bf16.msra.mxu0 %v492
    %541 = vmatpush.bf16.msra.mxu0 %v491
    %542 = vmatmul.bf16.gmra.mxu0 %v413
    %v543 = vpop.f32.mrf.mxu0
    %v544 = vadd.f32 %v525, %v543
    %v545 = vpop.f32.mrf.mxu0
    %v546 = vadd.f32 %v527, %v545
    %547 = vmatmul.bf16.gmra.mxu0 %v415
    %v548 = vpop.f32.mrf.mxu0
    %v549 = vadd.f32 %v530, %v548
    %v550 = vpop.f32.mrf.mxu0
    %v551 = vadd.f32 %v532, %v550
    %552 = vdwg.mxu0
    %v553 = vmax.f32 %v544, 0.0
    %v554 = vmax.f32 %v546, 0.0
    %v555 = vmax.f32 %v549, 0.0
    %v556 = vmax.f32 %v551, 0.0
    %v557 = vld [vmem:[#allocation8] sm:$0xf]
    %v558 = vld [vmem:[#allocation8 + $0x4] sm:$0xf]
    %v559 = vld [vmem:[#allocation8 + $0x8] sm:$0xf]
    %v560 = vld [vmem:[#allocation8 + $0xc] sm:$0xf]
    %v561 = vld [vmem:[#allocation8 + $0x10] sm:$0xf]
    %v562 = vld [vmem:[#allocation8 + $0x14] sm:$0xf]
    %v563 = vld [vmem:[#allocation8 + $0x18] sm:$0xf]
    %v564 = vld [vmem:[#allocation8 + $0x1c] sm:$0xf]
    %v565 = vld [vmem:[#allocation8 + $0x20] sm:$0xf]
    %v566 = vld [vmem:[#allocation8 + $0x24] sm:$0xf]
    %v567 = vld [vmem:[#allocation8 + $0x28] sm:$0xf]
    %v568 = vld [vmem:[#allocation8 + $0x2c] sm:$0xf]
    %v569 = vld [vmem:[#allocation8 + $0x30] sm:$0xf]
    %v570 = vld [vmem:[#allocation8 + $0x34] sm:$0xf]
    %v571 = vld [vmem:[#allocation8 + $0x38] sm:$0xf]
    %v572 = vld [vmem:[#allocation8 + $0x3c] sm:$0xf]
    %v573 = vld [vmem:[%s4] sm:$0x1]
    %v575 = vperm.slane %v573, 0
    %v593 = vunpack.c.l.b16 %v557
    %v594 = vunpack.c.l.b16 %v558
    %v595 = vunpack.c.l.b16 %v559
    %v596 = vunpack.c.l.b16 %v560
    %v597 = vunpack.c.l.b16 %v561
    %v598 = vunpack.c.l.b16 %v562
    %v599 = vunpack.c.l.b16 %v563
    %v600 = vunpack.c.l.b16 %v564
    %v601 = vunpack.c.l.b16 %v565
    %v602 = vunpack.c.l.b16 %v566
    %v603 = vunpack.c.l.b16 %v567
    %v604 = vunpack.c.l.b16 %v568
    %v605 = vunpack.c.l.b16 %v569
    %v606 = vunpack.c.l.b16 %v570
    %v607 = vunpack.c.l.b16 %v571
    %v608 = vunpack.c.l.b16 %v572
    %v609 = vpack.c.b16 %v594, %v593
    %v610 = vpack.c.b16 %v596, %v595
    %v611 = vpack.c.b16 %v598, %v597
    %v612 = vpack.c.b16 %v600, %v599
    %v613 = vpack.c.b16 %v602, %v601
    %v614 = vpack.c.b16 %v604, %v603
    %v615 = vpack.c.b16 %v606, %v605
    %v616 = vpack.c.b16 %v608, %v607
    %625 = vmatpush.bf16.msra.mxu0 %v616
    %626 = vmatpush.bf16.msra.mxu0 %v615
    %627 = vmatpush.bf16.msra.mxu0 %v614
    %628 = vmatpush.bf16.msra.mxu0 %v613
    %629 = vmatpush.bf16.msra.mxu0 %v612
    %630 = vmatpush.bf16.msra.mxu0 %v611
    %631 = vmatpush.bf16.msra.mxu0 %v610
    %632 = vmatpush.bf16.msra.mxu0 %v609
    %633 = vmatmul.bf16.gmra.mxu0 %v221
    %v634 = vpop.f32.mrf.mxu0
    %v635 = vadd.f32 %v575, %v634
    %v636 = vpop.f32.mrf.mxu0
    %v637 = vadd.f32 %v575, %v636
    %638 = vmatmul.bf16.gmra.mxu0 %v223
    %v639 = vpop.f32.mrf.mxu0
    %v640 = vadd.f32 %v575, %v639
    %v641 = vpop.f32.mrf.mxu0
    %v642 = vadd.f32 %v575, %v641
    %643 = vdwg.mxu0
    %v644 = vadd.f32 %v553, %v635
    %v645 = vadd.f32 %v554, %v637
    %v646 = vadd.f32 %v555, %v640
    %v647 = vadd.f32 %v556, %v642
    %v648 = vmax.f32 %v644, 0.0
    %v649 = vmax.f32 %v645, 0.0
    %v650 = vmax.f32 %v646, 0.0
    %v651 = vmax.f32 %v647, 0.0
    %vm652 = vcmp.ge.s32.totalorder %v158, 2
    %vm653 = vcmp.ge.s32.totalorder %v159, 2
    %vm654 = vcmp.ge.s32.totalorder %v160, 2
    %vm655 = vcmp.ge.s32.totalorder %v161, 2
    %v656 = vsel %vm652, 1, 0
    %v657 = vsel %vm653, 1, 0
    %v658 = vsel %vm654, 1, 0
    %v659 = vsel %vm655, 1, 0
    %vm660 = vcmp.eq.s32.totalorder %v656, 1
    %vm661 = vcmp.eq.s32.totalorder %v657, 1
    %vm662 = vcmp.eq.s32.totalorder %v658, 1
    %vm663 = vcmp.eq.s32.totalorder %v659, 1
    %s664 = scalar_lea.vmem [#allocation5], 256
    %v665 = vld [vmem:[%s664] sm:$0xf]
    %v666 = vld [vmem:[%s664 + $0x4] sm:$0xf]
    %v667 = vld [vmem:[%s664 + $0x8] sm:$0xf]
    %v668 = vld [vmem:[%s664 + $0xc] sm:$0xf]
    %v669 = vld [vmem:[%s664 + $0x10] sm:$0xf]
    %v670 = vld [vmem:[%s664 + $0x14] sm:$0xf]
    %v671 = vld [vmem:[%s664 + $0x18] sm:$0xf]
    %v672 = vld [vmem:[%s664 + $0x1c] sm:$0xf]
    %v673 = vld [vmem:[%s664 + $0x20] sm:$0xf]
    %v674 = vld [vmem:[%s664 + $0x24] sm:$0xf]
    %v675 = vld [vmem:[%s664 + $0x28] sm:$0xf]
    %v676 = vld [vmem:[%s664 + $0x2c] sm:$0xf]
    %v677 = vld [vmem:[%s664 + $0x30] sm:$0xf]
    %v678 = vld [vmem:[%s664 + $0x34] sm:$0xf]
    %v679 = vld [vmem:[%s664 + $0x38] sm:$0xf]
    %v680 = vld [vmem:[%s664 + $0x3c] sm:$0xf]
    %v681 = vld [vmem:[%s664 + $0x40] sm:$0xf]
    %v682 = vld [vmem:[%s664 + $0x44] sm:$0xf]
    %v683 = vld [vmem:[%s664 + $0x48] sm:$0xf]
    %v684 = vld [vmem:[%s664 + $0x4c] sm:$0xf]
    %v685 = vld [vmem:[%s664 + $0x50] sm:$0xf]
    %v686 = vld [vmem:[%s664 + $0x54] sm:$0xf]
    %v687 = vld [vmem:[%s664 + $0x58] sm:$0xf]
    %v688 = vld [vmem:[%s664 + $0x5c] sm:$0xf]
    %v689 = vld [vmem:[%s664 + $0x60] sm:$0xf]
    %v690 = vld [vmem:[%s664 + $0x64] sm:$0xf]
    %v691 = vld [vmem:[%s664 + $0x68] sm:$0xf]
    %v692 = vld [vmem:[%s664 + $0x6c] sm:$0xf]
    %v693 = vld [vmem:[%s664 + $0x70] sm:$0xf]
    %v694 = vld [vmem:[%s664 + $0x74] sm:$0xf]
    %v695 = vld [vmem:[%s664 + $0x78] sm:$0xf]
    %v696 = vld [vmem:[%s664 + $0x7c] sm:$0xf]
    %s697 = scalar_lea.vmem [#allocation7], 2
    %v698 = vld [vmem:[%s697] sm:$0x1]
    %v699 = vrot.slane %v648, 6
    %v700 = vrot.slane %v649, 6
    %v701 = vrot.slane %v650, 6
    %v702 = vrot.slane %v651, 6
    %vm703 = vcmp.lt.s32.totalorder %v110, 2
    %v704 = vsel %vm703, %v701, %v702
    %v705 = vsel %vm703, %v700, %v701
    %v706 = vsel %vm703, %v699, %v700
    %v707 = vsel %vm703, %v702, %v699
    %v708 = vsel %vm660, %v707, 0.0
    %v709 = vsel %vm661, %v706, 0.0
    %v710 = vsel %vm662, %v705, 0.0
    %v711 = vsel %vm663, %v704, 0.0
    %v712 = vpack.c.bf16 %v709, %v708
    %v713 = vpack.c.bf16 %v649, %v648
    %v714 = vpack.c.bf16 %v711, %v710
    %v715 = vpack.c.bf16 %v651, %v650
    %v717 = vperm.slane %v698, 0
    %v751 = vunpack.c.l.b16 %v665
    %v752 = vunpack.c.l.b16 %v666
    %v753 = vunpack.c.l.b16 %v667
    %v754 = vunpack.c.l.b16 %v668
    %v755 = vunpack.c.l.b16 %v669
    %v756 = vunpack.c.l.b16 %v670
    %v757 = vunpack.c.l.b16 %v671
    %v758 = vunpack.c.l.b16 %v672
    %v759 = vunpack.c.l.b16 %v673
    %v760 = vunpack.c.l.b16 %v674
    %v761 = vunpack.c.l.b16 %v675
    %v762 = vunpack.c.l.b16 %v676
    %v763 = vunpack.c.l.b16 %v677
    %v764 = vunpack.c.l.b16 %v678
    %v765 = vunpack.c.l.b16 %v679
    %v766 = vunpack.c.l.b16 %v680
    %v767 = vunpack.c.l.b16 %v681
    %v768 = vunpack.c.l.b16 %v682
    %v769 = vunpack.c.l.b16 %v683
    %v770 = vunpack.c.l.b16 %v684
    %v771 = vunpack.c.l.b16 %v685
    %v772 = vunpack.c.l.b16 %v686
    %v773 = vunpack.c.l.b16 %v687
    %v774 = vunpack.c.l.b16 %v688
    %v775 = vunpack.c.l.b16 %v689
    %v776 = vunpack.c.l.b16 %v690
    %v777 = vunpack.c.l.b16 %v691
    %v778 = vunpack.c.l.b16 %v692
    %v779 = vunpack.c.l.b16 %v693
    %v780 = vunpack.c.l.b16 %v694
    %v781 = vunpack.c.l.b16 %v695
    %v782 = vunpack.c.l.b16 %v696
    %v783 = vpack.c.b16 %v752, %v751
    %v784 = vpack.c.b16 %v754, %v753
    %v785 = vpack.c.b16 %v756, %v755
    %v786 = vpack.c.b16 %v758, %v757
    %v787 = vpack.c.b16 %v760, %v759
    %v788 = vpack.c.b16 %v762, %v761
    %v789 = vpack.c.b16 %v764, %v763
    %v790 = vpack.c.b16 %v766, %v765
    %v791 = vpack.c.b16 %v768, %v767
    %v792 = vpack.c.b16 %v770, %v769
    %v793 = vpack.c.b16 %v772, %v771
    %v794 = vpack.c.b16 %v774, %v773
    %v795 = vpack.c.b16 %v776, %v775
    %v796 = vpack.c.b16 %v778, %v777
    %v797 = vpack.c.b16 %v780, %v779
    %v798 = vpack.c.b16 %v782, %v781
    %815 = vmatpush.bf16.msra.mxu0 %v790
    %816 = vmatpush.bf16.msra.mxu0 %v789
    %817 = vmatpush.bf16.msra.mxu0 %v788
    %818 = vmatpush.bf16.msra.mxu0 %v787
    %819 = vmatpush.bf16.msra.mxu0 %v786
    %820 = vmatpush.bf16.msra.mxu0 %v785
    %821 = vmatpush.bf16.msra.mxu0 %v784
    %822 = vmatpush.bf16.msra.mxu0 %v783
    %823 = vmatmul.bf16.gmra.mxu0 %v712
    %v824 = vpop.f32.mrf.mxu0
    %v825 = vadd.f32 %v717, %v824
    %v826 = vpop.f32.mrf.mxu0
    %v827 = vadd.f32 %v717, %v826
    %828 = vmatmul.bf16.gmra.mxu0 %v714
    %v829 = vpop.f32.mrf.mxu0
    %v830 = vadd.f32 %v717, %v829
    %v831 = vpop.f32.mrf.mxu0
    %v832 = vadd.f32 %v717, %v831
    %833 = vdwg.mxu0
    %834 = vmatpush.bf16.msra.mxu0 %v798
    %835 = vmatpush.bf16.msra.mxu0 %v797
    %836 = vmatpush.bf16.msra.mxu0 %v796
    %837 = vmatpush.bf16.msra.mxu0 %v795
    %838 = vmatpush.bf16.msra.mxu0 %v794
    %839 = vmatpush.bf16.msra.mxu0 %v793
    %840 = vmatpush.bf16.msra.mxu0 %v792
    %841 = vmatpush.bf16.msra.mxu0 %v791
    %842 = vmatmul.bf16.gmra.mxu0 %v713
    %v843 = vpop.f32.mrf.mxu0
    %v844 = vadd.f32 %v825, %v843
    %v845 = vpop.f32.mrf.mxu0
    %v846 = vadd.f32 %v827, %v845
    %847 = vmatmul.bf16.gmra.mxu0 %v715
    %v848 = vpop.f32.mrf.mxu0
    %v849 = vadd.f32 %v830, %v848
    %v850 = vpop.f32.mrf.mxu0
    %v851 = vadd.f32 %v832, %v850
    %852 = vdwg.mxu0
    %v853 = vmax.f32 %v844, 0.0
    %v854 = vmax.f32 %v846, 0.0
    %v855 = vmax.f32 %v849, 0.0
    %v856 = vmax.f32 %v851, 0.0
    %s857 = scalar_lea.vmem [#allocation5], 384
    %v858 = vld [vmem:[%s857] sm:$0xf]
    %v859 = vld [vmem:[%s857 + $0x4] sm:$0xf]
    %v860 = vld [vmem:[%s857 + $0x8] sm:$0xf]
    %v861 = vld [vmem:[%s857 + $0xc] sm:$0xf]
    %v862 = vld [vmem:[%s857 + $0x10] sm:$0xf]
    %v863 = vld [vmem:[%s857 + $0x14] sm:$0xf]
    %v864 = vld [vmem:[%s857 + $0x18] sm:$0xf]
    %v865 = vld [vmem:[%s857 + $0x1c] sm:$0xf]
    %v866 = vld [vmem:[%s857 + $0x20] sm:$0xf]
    %v867 = vld [vmem:[%s857 + $0x24] sm:$0xf]
    %v868 = vld [vmem:[%s857 + $0x28] sm:$0xf]
    %v869 = vld [vmem:[%s857 + $0x2c] sm:$0xf]
    %v870 = vld [vmem:[%s857 + $0x30] sm:$0xf]
    %v871 = vld [vmem:[%s857 + $0x34] sm:$0xf]
    %v872 = vld [vmem:[%s857 + $0x38] sm:$0xf]
    %v873 = vld [vmem:[%s857 + $0x3c] sm:$0xf]
    %v874 = vld [vmem:[%s857 + $0x40] sm:$0xf]
    %v875 = vld [vmem:[%s857 + $0x44] sm:$0xf]
    %v876 = vld [vmem:[%s857 + $0x48] sm:$0xf]
    %v877 = vld [vmem:[%s857 + $0x4c] sm:$0xf]
    %v878 = vld [vmem:[%s857 + $0x50] sm:$0xf]
    %v879 = vld [vmem:[%s857 + $0x54] sm:$0xf]
    %v880 = vld [vmem:[%s857 + $0x58] sm:$0xf]
    %v881 = vld [vmem:[%s857 + $0x5c] sm:$0xf]
    %v882 = vld [vmem:[%s857 + $0x60] sm:$0xf]
    %v883 = vld [vmem:[%s857 + $0x64] sm:$0xf]
    %v884 = vld [vmem:[%s857 + $0x68] sm:$0xf]
    %v885 = vld [vmem:[%s857 + $0x6c] sm:$0xf]
    %v886 = vld [vmem:[%s857 + $0x70] sm:$0xf]
    %v887 = vld [vmem:[%s857 + $0x74] sm:$0xf]
    %v888 = vld [vmem:[%s857 + $0x78] sm:$0xf]
    %v889 = vld [vmem:[%s857 + $0x7c] sm:$0xf]
    %s890 = scalar_lea.vmem [#allocation7], 3
    %v891 = vld [vmem:[%s890] sm:$0x1]
    %v892 = vrot.slane %v853, 6
    %v893 = vrot.slane %v854, 6
    %v894 = vrot.slane %v855, 6
    %v895 = vrot.slane %v856, 6
    %v896 = vsel %vm703, %v894, %v895
    %v897 = vsel %vm703, %v893, %v894
    %v898 = vsel %vm703, %v892, %v893
    %v899 = vsel %vm703, %v895, %v892
    %v900 = vsel %vm660, %v899, 0.0
    %v901 = vsel %vm661, %v898, 0.0
    %v902 = vsel %vm662, %v897, 0.0
    %v903 = vsel %vm663, %v896, 0.0
    %v904 = vpack.c.bf16 %v901, %v900
    %v905 = vpack.c.bf16 %v854, %v853
    %v906 = vpack.c.bf16 %v903, %v902
    %v907 = vpack.c.bf16 %v856, %v855
    %v909 = vperm.slane %v891, 0
    %v943 = vunpack.c.l.b16 %v858
    %v944 = vunpack.c.l.b16 %v859
    %v945 = vunpack.c.l.b16 %v860
    %v946 = vunpack.c.l.b16 %v861
    %v947 = vunpack.c.l.b16 %v862
    %v948 = vunpack.c.l.b16 %v863
    %v949 = vunpack.c.l.b16 %v864
    %v950 = vunpack.c.l.b16 %v865
    %v951 = vunpack.c.l.b16 %v866
    %v952 = vunpack.c.l.b16 %v867
    %v953 = vunpack.c.l.b16 %v868
    %v954 = vunpack.c.l.b16 %v869
    %v955 = vunpack.c.l.b16 %v870
    %v956 = vunpack.c.l.b16 %v871
    %v957 = vunpack.c.l.b16 %v872
    %v958 = vunpack.c.l.b16 %v873
    %v959 = vunpack.c.l.b16 %v874
    %v960 = vunpack.c.l.b16 %v875
    %v961 = vunpack.c.l.b16 %v876
    %v962 = vunpack.c.l.b16 %v877
    %v963 = vunpack.c.l.b16 %v878
    %v964 = vunpack.c.l.b16 %v879
    %v965 = vunpack.c.l.b16 %v880
    %v966 = vunpack.c.l.b16 %v881
    %v967 = vunpack.c.l.b16 %v882
    %v968 = vunpack.c.l.b16 %v883
    %v969 = vunpack.c.l.b16 %v884
    %v970 = vunpack.c.l.b16 %v885
    %v971 = vunpack.c.l.b16 %v886
    %v972 = vunpack.c.l.b16 %v887
    %v973 = vunpack.c.l.b16 %v888
    %v974 = vunpack.c.l.b16 %v889
    %v975 = vpack.c.b16 %v944, %v943
    %v976 = vpack.c.b16 %v946, %v945
    %v977 = vpack.c.b16 %v948, %v947
    %v978 = vpack.c.b16 %v950, %v949
    %v979 = vpack.c.b16 %v952, %v951
    %v980 = vpack.c.b16 %v954, %v953
    %v981 = vpack.c.b16 %v956, %v955
    %v982 = vpack.c.b16 %v958, %v957
    %v983 = vpack.c.b16 %v960, %v959
    %v984 = vpack.c.b16 %v962, %v961
    %v985 = vpack.c.b16 %v964, %v963
    %v986 = vpack.c.b16 %v966, %v965
    %v987 = vpack.c.b16 %v968, %v967
    %v988 = vpack.c.b16 %v970, %v969
    %v989 = vpack.c.b16 %v972, %v971
    %v990 = vpack.c.b16 %v974, %v973
    %1007 = vmatpush.bf16.msra.mxu0 %v982
    %1008 = vmatpush.bf16.msra.mxu0 %v981
    %1009 = vmatpush.bf16.msra.mxu0 %v980
    %1010 = vmatpush.bf16.msra.mxu0 %v979
    %1011 = vmatpush.bf16.msra.mxu0 %v978
    %1012 = vmatpush.bf16.msra.mxu0 %v977
    %1013 = vmatpush.bf16.msra.mxu0 %v976
    %1014 = vmatpush.bf16.msra.mxu0 %v975
    %1015 = vmatmul.bf16.gmra.mxu0 %v904
    %v1016 = vpop.f32.mrf.mxu0
    %v1017 = vpop.f32.mrf.mxu0
    %v1018 = vadd.f32 %v909, %v1017
    %1019 = vmatmul.bf16.gmra.mxu0 %v906
    %v1020 = vpop.f32.mrf.mxu0
    %v1021 = vpop.f32.mrf.mxu0
    %v1022 = vadd.f32 %v909, %v1021
    %1023 = vdwg.mxu0
    %1024 = vmatpush.bf16.msra.mxu0 %v990
    %1025 = vmatpush.bf16.msra.mxu0 %v989
    %1026 = vmatpush.bf16.msra.mxu0 %v988
    %1027 = vmatpush.bf16.msra.mxu0 %v987
    %1028 = vmatpush.bf16.msra.mxu0 %v986
    %1029 = vmatpush.bf16.msra.mxu0 %v985
    %1030 = vmatpush.bf16.msra.mxu0 %v984
    %1031 = vmatpush.bf16.msra.mxu0 %v983
    %1032 = vmatmul.bf16.gmra.mxu0 %v905
    %v1033 = vpop.f32.mrf.mxu0
    %v1034 = vpop.f32.mrf.mxu0
    %v1035 = vadd.f32 %v1018, %v1034
    %1036 = vmatmul.bf16.gmra.mxu0 %v907
    %v1037 = vpop.f32.mrf.mxu0
    %v1038 = vpop.f32.mrf.mxu0
    %v1039 = vadd.f32 %v1022, %v1038
    %1040 = vdwg.mxu0
    %v1041 = vmax.f32 %v1035, 0.0
    %v1042 = vmax.f32 %v1039, 0.0
    %v1043 = vadd.f32 %v1041, %v649
    %v1044 = vadd.f32 %v1042, %v651
    %v1045 = vmax.f32 %v1043, 0.0
    %v1046 = vmax.f32 %v1044, 0.0
    %v1047 = vpack.c.bf16 %v1045, %v1045
    %v1048 = vpack.c.bf16 %v1046, %v1046
    %v1049 = vld [vmem:[#allocation10] sm:$0xf]
    %v1050 = vld [vmem:[#allocation10 + $0x4] sm:$0xf]
    %v1051 = vld [vmem:[#allocation10 + $0x8] sm:$0xf]
    %v1052 = vld [vmem:[#allocation10 + $0xc] sm:$0xf]
    %v1053 = vld [vmem:[#allocation10 + $0x10] sm:$0xf]
    %v1054 = vld [vmem:[#allocation10 + $0x14] sm:$0xf]
    %v1055 = vld [vmem:[#allocation10 + $0x18] sm:$0xf]
    %v1056 = vld [vmem:[#allocation10 + $0x1c] sm:$0xf]
    %v1057 = vld [vmem:[#allocation10 + $0x20] sm:$0xf]
    %v1058 = vld [vmem:[#allocation10 + $0x24] sm:$0xf]
    %v1059 = vld [vmem:[#allocation10 + $0x28] sm:$0xf]
    %v1060 = vld [vmem:[#allocation10 + $0x2c] sm:$0xf]
    %v1061 = vld [vmem:[#allocation10 + $0x30] sm:$0xf]
    %v1062 = vld [vmem:[#allocation10 + $0x34] sm:$0xf]
    %v1063 = vld [vmem:[#allocation10 + $0x38] sm:$0xf]
    %v1064 = vld [vmem:[#allocation10 + $0x3c] sm:$0xf]
    %v1065 = vld [vmem:[%s6] sm:$0x1]
    %v1067 = vperm.slane %v1065, 0
    %v1071 = vunpack.c.l.b16 %v1047
    %v1072 = vunpack.c.l.b16 %v1048
    %v1073 = vrot.slane %v1071, 7
    %v1074 = vrot.slane %v1072, 6
    %vm1075 = vcmask 1041409
    %v1076 = vsel %vm1075, %v1074, %v1073
    %v1077 = vpack.c.b16 %v1076, %v1076
    %v1095 = vunpack.c.l.b16 %v1049
    %v1096 = vunpack.c.l.b16 %v1050
    %v1097 = vunpack.c.l.b16 %v1051
    %v1098 = vunpack.c.l.b16 %v1052
    %v1099 = vunpack.c.l.b16 %v1053
    %v1100 = vunpack.c.l.b16 %v1054
    %v1101 = vunpack.c.l.b16 %v1055
    %v1102 = vunpack.c.l.b16 %v1056
    %v1103 = vunpack.c.l.b16 %v1057
    %v1104 = vunpack.c.l.b16 %v1058
    %v1105 = vunpack.c.l.b16 %v1059
    %v1106 = vunpack.c.l.b16 %v1060
    %v1107 = vunpack.c.l.b16 %v1061
    %v1108 = vunpack.c.l.b16 %v1062
    %v1109 = vunpack.c.l.b16 %v1063
    %v1110 = vunpack.c.l.b16 %v1064
    %v1111 = vpack.c.b16 %v1096, %v1095
    %v1112 = vpack.c.b16 %v1098, %v1097
    %v1113 = vpack.c.b16 %v1100, %v1099
    %v1114 = vpack.c.b16 %v1102, %v1101
    %v1115 = vpack.c.b16 %v1104, %v1103
    %v1116 = vpack.c.b16 %v1106, %v1105
    %v1117 = vpack.c.b16 %v1108, %v1107
    %v1118 = vpack.c.b16 %v1110, %v1109
    %1127 = vmatpush.bf16.msra.mxu0 %v1118
    %1128 = vmatpush.bf16.msra.mxu0 %v1117
    %1129 = vmatpush.bf16.msra.mxu0 %v1116
    %1130 = vmatpush.bf16.msra.mxu0 %v1115
    %1131 = vmatpush.bf16.msra.mxu0 %v1114
    %1132 = vmatpush.bf16.msra.mxu0 %v1113
    %1133 = vmatpush.bf16.msra.mxu0 %v1112
    %1134 = vmatpush.bf16.msra.mxu0 %v1111
    %1135 = vmatmul.bf16.gmra.mxu0 %v1077
    %v1136 = vpop.f32.mrf.mxu0
    %v1137 = vadd.f32 %v1067, %v1136
    %v1138 = vpop.f32.mrf.mxu0
    %1139 = vdwg.mxu0
    %v1141 = vrot.slane %v1137, 1
    %1143 = vst [vmem:[#allocation11] sm:$0x1] %v1137
    %1144 = vst [vmem:[#allocation11 + $0x1] sm:$0x1] %v1141
    // Predicated region
    $region50: #{tpu_custom_call.1} parent=1 // pred_check
      _
    $region51: #{tpu_custom_call.1} parent=1 // pred_check_branch
      %1146 = sbr.rel (0) target = $region53
    $region52: #{tpu_custom_call.1} parent=1 // pred_region
      %1148 = vsyncadd [#allocation4], 0
      %s1149 = sshll.u32 [#allocation11], 4
      %s1150 = int_to_ptr.vmem [resolvable:$true] %s1149
      %s1151 = sshll.u32 %s7, 4
      %s1152 = int_to_ptr.hbm [resolvable:$true] %s1151
      %1157 = dma.vmem_to_hbm [thread:$0]  %s1150, 32, %s1152, [#allocation4], 16, 16, 1
    $region53: #{tpu_custom_call.1} parent=1 // pred_fallthru
      _
    // Predicated region
    $region54: #{tpu_custom_call.1} parent=1 // pred_check
      _
    $region55: #{tpu_custom_call.1} parent=1 // pred_check_branch
      %1159 = sbr.rel (0) target = $region57
    $region56: #{tpu_custom_call.1} parent=1 // pred_region
      %1161 = dma.done [#allocation4], 32
    $region57: #{tpu_custom_call.1} parent=1 // pred_fallthru
      _
    %1162 = vsyncpa [#allocation3], 1
    %1163 = vsyncpa [#allocation6], 1
    %1164 = vsyncpa [#allocation9], 1
    %1165 = vsyncpa [#allocation4], 1

</llo_original>
